<compile_context>
chip_gen: v7x
topology: tpu7x:2x2x1
jax: 0.10.0
libtpu: 0.0.40
codegen_flags: <defaults>
</compile_context>

<pallas_src>
import functools

import jax
import jax.numpy as jnp
from jax.experimental import pallas as pl
from jax.experimental.pallas import tpu as pltpu

EPS = 1e-5
LANE = 128
# PyTorch layer widths: input_dim -> 356 -> 512 -> 356 -> 128 -> 128 -> output_dim
HIDDEN = (356, 512, 356, 128, 128)
# Lane-aligned padded widths used inside the kernel.
HIDDEN_PAD = (384, 512, 384, 128, 128)


def _round_up(n, m):
    return (n + m - 1) // m * m


def _has_bf16_vpu():
    """v6e/v7x VALUs support packed bf16; v5e/v5p/v4 and older do not."""
    try:
        kind = jax.devices()[0].device_kind.lower()
    except Exception:  # pragma: no cover - fall back to the always-correct f32 path
        return False
    return not any(tag in kind for tag in ("v2", "v3", "v4", "v5"))


def _pick_batch_tile(batch):
    """Batch-tile selection (see perf review).

    - batch <= 256: single grid step; round to 16 rows so bf16 intermediates stay
      fully sublane-packed.  This regime is bound by the one-shot ~1.2 MB weight
      DMA + launch overhead, not the MXU, so no tile tuning helps here.
    - 256 < batch <= 2048: exactly 2 (even) grid steps so both v7x TensorCores are
      busy; tile is a multiple of 256 (MXU-aligned) and as large as possible.
    - batch > 2048: 1024-row tiles; per-step VMEM stays well under every
      generation's limit (~8 MB incl. double-buffered activations).
    """
    if batch <= 256:
        return _round_up(max(batch, 1), 16)
    if batch <= 2048:
        return min(1024, _round_up(pl.cdiv(batch, 2), 256))
    return 1024


def _mlp_kernel(x_ref, *refs, bf16_epilogue):
    """One batch tile through the whole MLP.

    refs = (w0, b0, w1, b1, ..., w5, b5, out_ref); BN already folded into (w, b).
    Weights bf16 (MXU-native), biases f32, matmul accumulation f32.
    """
    out_ref = refs[-1]
    params = refs[:-1]

    h = x_ref[...].astype(jnp.bfloat16)  # in-kernel cast: x arrives as f32
    for li in range(5):
        w, b = params[2 * li], params[2 * li + 1]
        acc = jnp.dot(h, w[...], preferred_element_type=jnp.float32)
        if bf16_epilogue:
            # bf16 bias+ReLU: packed-bf16 VALU (v6e/v7x) halves epilogue VPU work.
            h = jnp.maximum(acc.astype(jnp.bfloat16) + b[...].astype(jnp.bfloat16), 0.0)
        else:
            # f32 epilogue for chips without bf16 VALUs (v5e and older).
            h = jnp.maximum(acc + b[...], 0.0).astype(jnp.bfloat16)
    w, b = params[10], params[11]
    y = jnp.dot(h, w[...], preferred_element_type=jnp.float32) + b[...]
    out_ref[...] = y.astype(out_ref.dtype)  # bf16 writeback (halved output DMA)


@functools.partial(jax.jit, static_argnames=("output_dim",))
def linear_net_forward(x, folded_params, output_dim):
    batch, in_dim = x.shape
    out_pad = folded_params[-1].shape[-1]

    tb = _pick_batch_tile(batch)
    bp = _round_up(batch, tb)

    x_p = x.astype(jnp.float32)  # no wrapper-side bf16 cast; cast happens in-kernel
    if bp != batch:
        x_p = jnp.pad(x_p, ((0, bp - batch), (0, 0)))

    grid = (bp // tb,)
    in_specs = [pl.BlockSpec((tb, in_dim), lambda i: (i, 0))]
    for p in folded_params:
        # Whole-array, constant block index -> fetched once and VMEM-resident across
        # the grid; Buffered(1) drops the useless second (double) buffer.
        in_specs.append(
            pl.BlockSpec(p.shape, lambda i: (0, 0), pipeline_mode=pl.Buffered(1)))
    out_specs = pl.BlockSpec((tb, out_pad), lambda i: (i, 0))

    flops = 2 * bp * sum(int(w.shape[0]) * int(w.shape[1]) for w in folded_params[0::2])
    bytes_accessed = (int(x_p.size) * 4 + bp * out_pad * 2
                      + sum(int(p.size) * p.dtype.itemsize for p in folded_params))

    kernel = functools.partial(_mlp_kernel, bf16_epilogue=_has_bf16_vpu())

    out = pl.pallas_call(
        kernel,
        out_shape=jax.ShapeDtypeStruct((bp, out_pad), jnp.bfloat16),
        grid=grid,
        in_specs=in_specs,
        out_specs=out_specs,
        compiler_params=pltpu.CompilerParams(dimension_semantics=("parallel",)),
        cost_estimate=pl.CostEstimate(flops=flops, transcendentals=0,
                                      bytes_accessed=bytes_accessed),
    )(x_p, *folded_params)
    # Slice off batch / lane padding; return f32 like the PyTorch module.
    return out[:batch, :output_dim].astype(jnp.float32)


def init_params(key, input_dim, output_dim):
    """Raw PyTorch-style params.

    nn.Linear: W, b ~ U(-1/sqrt(fan_in), 1/sqrt(fan_in)); W stored as (in, out).
    nn.BatchNorm1d: given non-trivial affine/running stats (as after training) so
    the BN-folding path is actually exercised by the self-test.
    """
    dims = (input_dim,) + HIDDEN + (output_dim,)
    raw = []
    for li in range(len(dims) - 1):
        fan_in, fan_out = dims[li], dims[li + 1]
        key, kw, kb, kg, kbe, km, kv = jax.random.split(key, 7)
        bound = 1.0 / float(fan_in) ** 0.5
        w = jax.random.uniform(kw, (fan_in, fan_out), jnp.float32, -bound, bound)
        b = jax.random.uniform(kb, (fan_out,), jnp.float32, -bound, bound)
        if li < 5:
            bn = dict(
                gamma=1.0 + 0.1 * jax.random.normal(kg, (fan_out,), jnp.float32),
                beta=0.1 * jax.random.normal(kbe, (fan_out,), jnp.float32),
                mean=0.1 * jax.random.normal(km, (fan_out,), jnp.float32),
                var=1.0 + 0.1 * jax.random.uniform(kv, (fan_out,), jnp.float32),
            )
        else:
            bn = None
        raw.append((w, b, bn))
    return raw


def fold_and_pad_params(raw, input_dim, output_dim):
    """Fold eval-mode BN into (W, b), pad to lane-aligned widths, cast W to bf16."""
    dims_in_pad = (input_dim,) + HIDDEN_PAD
    dims_out_pad = HIDDEN_PAD + (_round_up(output_dim, LANE),)
    folded = []
    for li, (w, b, bn) in enumerate(raw):
        if bn is not None:
            scale = bn["gamma"] * jax.lax.rsqrt(bn["var"] + EPS)
            shift = bn["beta"] - bn["mean"] * scale
            w = w * scale[None, :]
            b = b * scale + shift
        d_in_p, d_out_p = dims_in_pad[li], dims_out_pad[li]
        w = jnp.pad(w, ((0, d_in_p - w.shape[0]), (0, d_out_p - w.shape[1])))
        b = jnp.pad(b, ((0, d_out_p - b.shape[0]),))
        folded.append(w.astype(jnp.bfloat16))
        folded.append(b.reshape(1, d_out_p).astype(jnp.float32))
    return folded


def reference_forward_folded(x, folded_params, output_dim):
    """Pure-JAX reference mirroring the kernel math (bf16 operands, f32 accumulate),
    built from the SAME folded+padded params the kernel consumes."""
    h = x.astype(jnp.bfloat16)
    for li in range(5):
        w, b = folded_params[2 * li], folded_params[2 * li + 1]
        acc = jnp.dot(h, w, preferred_element_type=jnp.float32) + b
        h = jnp.maximum(acc, 0.0).astype(jnp.bfloat16)
    w, b = folded_params[10], folded_params[11]
    y = jnp.dot(h, w, preferred_element_type=jnp.float32) + b
    return y[:, :output_dim]


def reference_forward_raw(x, raw):
    """Unfolded f32 reference equivalent to the PyTorch module in eval mode."""
    h = x.astype(jnp.float32)
    for (w, b, bn) in raw:
        h = h @ w + b
        if bn is not None:
            h = (h - bn["mean"]) * jax.lax.rsqrt(bn["var"] + EPS) * bn["gamma"] + bn["beta"]
            h = jnp.maximum(h, 0.0)
    return h


if __name__ == "__main__":
    input_dim = 32
    output_dim = 16
    batch = 8

    key = jax.random.PRNGKey(0)
    key, kx = jax.random.split(key)
    x = jax.random.normal(kx, (batch, input_dim), jnp.float32)

    raw = init_params(key, input_dim, output_dim)
    folded = fold_and_pad_params(raw, input_dim, output_dim)

    out = linear_net_forward(x, folded, output_dim)
    out = jax.block_until_ready(out)
    assert out.shape == (batch, output_dim), out.shape

    # Check 1: kernel vs a reference using the SAME folded/padded bf16 params
    # (validates tiling, padding, grid, epilogue, writeback).
    ref_folded = reference_forward_folded(x, folded, output_dim)
    assert jnp.allclose(out, ref_folded, atol=2e-2, rtol=2e-2), "mismatch vs folded ref"

    # Check 2: kernel vs the UNFOLDED f32 (PyTorch-equivalent) reference
    # (validates BN folding + the bf16 dtype pipeline end-to-end).
    ref_raw = reference_forward_raw(x, raw)
    assert jnp.allclose(out, ref_raw, atol=5e-2, rtol=5e-2), "mismatch vs raw f32 ref"

    print("KERNEL_OK")
</pallas_src>

<mosaic_0001>
module attributes {stable_mosaic.version = 11 : i64} {
  func.func @_mlp_kernel(%arg0: i32, %arg1: memref<16x32xf32, #tpu.memory_space<vmem>>, %arg2: memref<32x384xbf16, #tpu.memory_space<vmem>>, %arg3: memref<1x384xf32, #tpu.memory_space<vmem>>, %arg4: memref<384x512xbf16, #tpu.memory_space<vmem>>, %arg5: memref<1x512xf32, #tpu.memory_space<vmem>>, %arg6: memref<512x384xbf16, #tpu.memory_space<vmem>>, %arg7: memref<1x384xf32, #tpu.memory_space<vmem>>, %arg8: memref<384x128xbf16, #tpu.memory_space<vmem>>, %arg9: memref<1x128xf32, #tpu.memory_space<vmem>>, %arg10: memref<128x128xbf16, #tpu.memory_space<vmem>>, %arg11: memref<1x128xf32, #tpu.memory_space<vmem>>, %arg12: memref<128x128xbf16, #tpu.memory_space<vmem>>, %arg13: memref<1x128xf32, #tpu.memory_space<vmem>>, %arg14: memref<16x128xbf16, #tpu.memory_space<vmem>>) attributes {dimension_semantics = [#tpu.dimension_semantics<parallel>], iteration_bounds = array<i64: 1>, scalar_prefetch = 0 : i64, scratch_operands = 0 : i64, tpu.core_type = #tpu.core_type<tc>, window_params = [{transform_indices = @transform_0, window_bounds = array<i64: 16, 32>}, {pipeline_mode = #tpu.pipeline_mode<synchronous>, transform_indices = @transform_1, window_bounds = array<i64: 32, 384>}, {pipeline_mode = #tpu.pipeline_mode<synchronous>, transform_indices = @transform_2, window_bounds = array<i64: 1, 384>}, {pipeline_mode = #tpu.pipeline_mode<synchronous>, transform_indices = @transform_3, window_bounds = array<i64: 384, 512>}, {pipeline_mode = #tpu.pipeline_mode<synchronous>, transform_indices = @transform_4, window_bounds = array<i64: 1, 512>}, {pipeline_mode = #tpu.pipeline_mode<synchronous>, transform_indices = @transform_5, window_bounds = array<i64: 512, 384>}, {pipeline_mode = #tpu.pipeline_mode<synchronous>, transform_indices = @transform_6, window_bounds = array<i64: 1, 384>}, {pipeline_mode = #tpu.pipeline_mode<synchronous>, transform_indices = @transform_7, window_bounds = array<i64: 384, 128>}, {pipeline_mode = #tpu.pipeline_mode<synchronous>, transform_indices = @transform_8, window_bounds = array<i64: 1, 128>}, {pipeline_mode = #tpu.pipeline_mode<synchronous>, transform_indices = @transform_9, window_bounds = array<i64: 128, 128>}, {pipeline_mode = #tpu.pipeline_mode<synchronous>, transform_indices = @transform_10, window_bounds = array<i64: 1, 128>}, {pipeline_mode = #tpu.pipeline_mode<synchronous>, transform_indices = @transform_11, window_bounds = array<i64: 128, 128>}, {pipeline_mode = #tpu.pipeline_mode<synchronous>, transform_indices = @transform_12, window_bounds = array<i64: 1, 128>}, {transform_indices = @transform_13, window_bounds = array<i64: 16, 128>}]} {
    %c0 = arith.constant 0 : index
    %c0_0 = arith.constant 0 : index
    %0 = vector.load %arg1[%c0, %c0_0] : memref<16x32xf32, #tpu.memory_space<vmem>>, vector<16x32xf32>
    %1 = arith.truncf %0 : vector<16x32xf32> to vector<16x32xbf16>
    %c0_1 = arith.constant 0 : index
    %c0_2 = arith.constant 0 : index
    %2 = vector.load %arg2[%c0_1, %c0_2] : memref<32x384xbf16, #tpu.memory_space<vmem>>, vector<32x384xbf16>
    %cst = arith.constant dense<0.000000e+00> : vector<16x384xf32>
    %3 = tpu.matmul %1, %2, %cst {dimension_numbers = #tpu.dot_dimension_numbers<[1], [0], [0], [1], [0, 0, 1, 1], [], []>} : vector<16x32xbf16>, vector<32x384xbf16>, vector<16x384xf32> -> vector<16x384xf32>
    %4 = arith.truncf %3 : vector<16x384xf32> to vector<16x384xbf16>
    %c0_3 = arith.constant 0 : index
    %c0_4 = arith.constant 0 : index
    %5 = vector.load %arg3[%c0_3, %c0_4] : memref<1x384xf32, #tpu.memory_space<vmem>>, vector<1x384xf32>
    %6 = arith.truncf %5 : vector<1x384xf32> to vector<1x384xbf16>
    %7 = vector.broadcast %6 : vector<1x384xbf16> to vector<16x384xbf16>
    %8 = arith.addf %4, %7 : vector<16x384xbf16>
    %cst_5 = arith.constant 0.000000e+00 : bf16
    %9 = vector.broadcast %cst_5 : bf16 to vector<16x384xbf16>
    %10 = arith.maximumf %8, %9 : vector<16x384xbf16>
    %c0_6 = arith.constant 0 : index
    %c0_7 = arith.constant 0 : index
    %11 = vector.load %arg4[%c0_6, %c0_7] : memref<384x512xbf16, #tpu.memory_space<vmem>>, vector<384x512xbf16>
    %cst_8 = arith.constant dense<0.000000e+00> : vector<16x512xf32>
    %12 = tpu.matmul %10, %11, %cst_8 {dimension_numbers = #tpu.dot_dimension_numbers<[1], [0], [0], [1], [0, 0, 1, 1], [], []>} : vector<16x384xbf16>, vector<384x512xbf16>, vector<16x512xf32> -> vector<16x512xf32>
    %13 = arith.truncf %12 : vector<16x512xf32> to vector<16x512xbf16>
    %c0_9 = arith.constant 0 : index
    %c0_10 = arith.constant 0 : index
    %14 = vector.load %arg5[%c0_9, %c0_10] : memref<1x512xf32, #tpu.memory_space<vmem>>, vector<1x512xf32>
    %15 = arith.truncf %14 : vector<1x512xf32> to vector<1x512xbf16>
    %16 = vector.broadcast %15 : vector<1x512xbf16> to vector<16x512xbf16>
    %17 = arith.addf %13, %16 : vector<16x512xbf16>
    %cst_11 = arith.constant 0.000000e+00 : bf16
    %18 = vector.broadcast %cst_11 : bf16 to vector<16x512xbf16>
    %19 = arith.maximumf %17, %18 : vector<16x512xbf16>
    %c0_12 = arith.constant 0 : index
    %c0_13 = arith.constant 0 : index
    %20 = vector.load %arg6[%c0_12, %c0_13] : memref<512x384xbf16, #tpu.memory_space<vmem>>, vector<512x384xbf16>
    %cst_14 = arith.constant dense<0.000000e+00> : vector<16x384xf32>
    %21 = tpu.matmul %19, %20, %cst_14 {dimension_numbers = #tpu.dot_dimension_numbers<[1], [0], [0], [1], [0, 0, 1, 1], [], []>} : vector<16x512xbf16>, vector<512x384xbf16>, vector<16x384xf32> -> vector<16x384xf32>
    %22 = arith.truncf %21 : vector<16x384xf32> to vector<16x384xbf16>
    %c0_15 = arith.constant 0 : index
    %c0_16 = arith.constant 0 : index
    %23 = vector.load %arg7[%c0_15, %c0_16] : memref<1x384xf32, #tpu.memory_space<vmem>>, vector<1x384xf32>
    %24 = arith.truncf %23 : vector<1x384xf32> to vector<1x384xbf16>
    %25 = vector.broadcast %24 : vector<1x384xbf16> to vector<16x384xbf16>
    %26 = arith.addf %22, %25 : vector<16x384xbf16>
    %cst_17 = arith.constant 0.000000e+00 : bf16
    %27 = vector.broadcast %cst_17 : bf16 to vector<16x384xbf16>
    %28 = arith.maximumf %26, %27 : vector<16x384xbf16>
    %c0_18 = arith.constant 0 : index
    %c0_19 = arith.constant 0 : index
    %29 = vector.load %arg8[%c0_18, %c0_19] : memref<384x128xbf16, #tpu.memory_space<vmem>>, vector<384x128xbf16>
    %cst_20 = arith.constant dense<0.000000e+00> : vector<16x128xf32>
    %30 = tpu.matmul %28, %29, %cst_20 {dimension_numbers = #tpu.dot_dimension_numbers<[1], [0], [0], [1], [0, 0, 1, 1], [], []>} : vector<16x384xbf16>, vector<384x128xbf16>, vector<16x128xf32> -> vector<16x128xf32>
    %31 = arith.truncf %30 : vector<16x128xf32> to vector<16x128xbf16>
    %c0_21 = arith.constant 0 : index
    %c0_22 = arith.constant 0 : index
    %32 = vector.load %arg9[%c0_21, %c0_22] : memref<1x128xf32, #tpu.memory_space<vmem>>, vector<1x128xf32>
    %33 = arith.truncf %32 : vector<1x128xf32> to vector<1x128xbf16>
    %34 = vector.broadcast %33 : vector<1x128xbf16> to vector<16x128xbf16>
    %35 = arith.addf %31, %34 : vector<16x128xbf16>
    %cst_23 = arith.constant 0.000000e+00 : bf16
    %36 = vector.broadcast %cst_23 : bf16 to vector<16x128xbf16>
    %37 = arith.maximumf %35, %36 : vector<16x128xbf16>
    %c0_24 = arith.constant 0 : index
    %c0_25 = arith.constant 0 : index
    %38 = vector.load %arg10[%c0_24, %c0_25] : memref<128x128xbf16, #tpu.memory_space<vmem>>, vector<128x128xbf16>
    %cst_26 = arith.constant dense<0.000000e+00> : vector<16x128xf32>
    %39 = tpu.matmul %37, %38, %cst_26 {dimension_numbers = #tpu.dot_dimension_numbers<[1], [0], [0], [1], [0, 0, 1, 1], [], []>} : vector<16x128xbf16>, vector<128x128xbf16>, vector<16x128xf32> -> vector<16x128xf32>
    %40 = arith.truncf %39 : vector<16x128xf32> to vector<16x128xbf16>
    %c0_27 = arith.constant 0 : index
    %c0_28 = arith.constant 0 : index
    %41 = vector.load %arg11[%c0_27, %c0_28] : memref<1x128xf32, #tpu.memory_space<vmem>>, vector<1x128xf32>
    %42 = arith.truncf %41 : vector<1x128xf32> to vector<1x128xbf16>
    %43 = vector.broadcast %42 : vector<1x128xbf16> to vector<16x128xbf16>
    %44 = arith.addf %40, %43 : vector<16x128xbf16>
    %cst_29 = arith.constant 0.000000e+00 : bf16
    %45 = vector.broadcast %cst_29 : bf16 to vector<16x128xbf16>
    %46 = arith.maximumf %44, %45 : vector<16x128xbf16>
    %c0_30 = arith.constant 0 : index
    %c0_31 = arith.constant 0 : index
    %47 = vector.load %arg12[%c0_30, %c0_31] : memref<128x128xbf16, #tpu.memory_space<vmem>>, vector<128x128xbf16>
    %cst_32 = arith.constant dense<0.000000e+00> : vector<16x128xf32>
    %48 = tpu.matmul %46, %47, %cst_32 {dimension_numbers = #tpu.dot_dimension_numbers<[1], [0], [0], [1], [0, 0, 1, 1], [], []>} : vector<16x128xbf16>, vector<128x128xbf16>, vector<16x128xf32> -> vector<16x128xf32>
    %c0_33 = arith.constant 0 : index
    %c0_34 = arith.constant 0 : index
    %49 = vector.load %arg13[%c0_33, %c0_34] : memref<1x128xf32, #tpu.memory_space<vmem>>, vector<1x128xf32>
    %50 = vector.broadcast %49 : vector<1x128xf32> to vector<16x128xf32>
    %51 = arith.addf %48, %50 : vector<16x128xf32>
    %52 = arith.truncf %51 : vector<16x128xf32> to vector<16x128xbf16>
    %c0_35 = arith.constant 0 : index
    %c0_36 = arith.constant 0 : index
    %53 = vector.load %arg14[%c0_35, %c0_36] : memref<16x128xbf16, #tpu.memory_space<vmem>>, vector<16x128xbf16>
    tpu.vector_store %arg14[%c0_35, %c0_36], %52 {strides = array<i32>} : memref<16x128xbf16, #tpu.memory_space<vmem>>, vector<16x128xbf16>,
    return
  }
  func.func @transform_0(%arg0: i32) -> (i32, i32) {
    %c0_i32 = arith.constant 0 : i32
    %c0_i32_0 = arith.constant 0 : i32
    return %arg0, %c0_i32 : i32, i32
  }
  func.func @transform_1(%arg0: i32) -> (i32, i32) {
    %c0_i32 = arith.constant 0 : i32
    %c0_i32_0 = arith.constant 0 : i32
    %c0_i32_1 = arith.constant 0 : i32
    return %c0_i32, %c0_i32_0 : i32, i32
  }
  func.func @transform_2(%arg0: i32) -> (i32, i32) {
    %c0_i32 = arith.constant 0 : i32
    %c0_i32_0 = arith.constant 0 : i32
    %c0_i32_1 = arith.constant 0 : i32
    return %c0_i32, %c0_i32_0 : i32, i32
  }
  func.func @transform_3(%arg0: i32) -> (i32, i32) {
    %c0_i32 = arith.constant 0 : i32
    %c0_i32_0 = arith.constant 0 : i32
    %c0_i32_1 = arith.constant 0 : i32
    return %c0_i32, %c0_i32_0 : i32, i32
  }
  func.func @transform_4(%arg0: i32) -> (i32, i32) {
    %c0_i32 = arith.constant 0 : i32
    %c0_i32_0 = arith.constant 0 : i32
    %c0_i32_1 = arith.constant 0 : i32
    return %c0_i32, %c0_i32_0 : i32, i32
  }
  func.func @transform_5(%arg0: i32) -> (i32, i32) {
    %c0_i32 = arith.constant 0 : i32
    %c0_i32_0 = arith.constant 0 : i32
    %c0_i32_1 = arith.constant 0 : i32
    return %c0_i32, %c0_i32_0 : i32, i32
  }
  func.func @transform_6(%arg0: i32) -> (i32, i32) {
    %c0_i32 = arith.constant 0 : i32
    %c0_i32_0 = arith.constant 0 : i32
    %c0_i32_1 = arith.constant 0 : i32
    return %c0_i32, %c0_i32_0 : i32, i32
  }
  func.func @transform_7(%arg0: i32) -> (i32, i32) {
    %c0_i32 = arith.constant 0 : i32
    %c0_i32_0 = arith.constant 0 : i32
    %c0_i32_1 = arith.constant 0 : i32
    return %c0_i32, %c0_i32_0 : i32, i32
  }
  func.func @transform_8(%arg0: i32) -> (i32, i32) {
    %c0_i32 = arith.constant 0 : i32
    %c0_i32_0 = arith.constant 0 : i32
    %c0_i32_1 = arith.constant 0 : i32
    return %c0_i32, %c0_i32_0 : i32, i32
  }
  func.func @transform_9(%arg0: i32) -> (i32, i32) {
    %c0_i32 = arith.constant 0 : i32
    %c0_i32_0 = arith.constant 0 : i32
    %c0_i32_1 = arith.constant 0 : i32
    return %c0_i32, %c0_i32_0 : i32, i32
  }
  func.func @transform_10(%arg0: i32) -> (i32, i32) {
    %c0_i32 = arith.constant 0 : i32
    %c0_i32_0 = arith.constant 0 : i32
    %c0_i32_1 = arith.constant 0 : i32
    return %c0_i32, %c0_i32_0 : i32, i32
  }
  func.func @transform_11(%arg0: i32) -> (i32, i32) {
    %c0_i32 = arith.constant 0 : i32
    %c0_i32_0 = arith.constant 0 : i32
    %c0_i32_1 = arith.constant 0 : i32
    return %c0_i32, %c0_i32_0 : i32, i32
  }
  func.func @transform_12(%arg0: i32) -> (i32, i32) {
    %c0_i32 = arith.constant 0 : i32
    %c0_i32_0 = arith.constant 0 : i32
    %c0_i32_1 = arith.constant 0 : i32
    return %c0_i32, %c0_i32_0 : i32, i32
  }
  func.func @transform_13(%arg0: i32) -> (i32, i32) {
    %c0_i32 = arith.constant 0 : i32
    %c0_i32_0 = arith.constant 0 : i32
    return %arg0, %c0_i32 : i32, i32
  }
}

</mosaic_0001>

<llo_original>
// kernel: linear_net_forward.1
$region0: #{linear_net_forward.1}
  #allocation0 [shape = 'u32[]', space=smem, size = 0x4, offset = 0x4, fixed_abs, tag = 'smem constant byte address 0x4 - core index']
  #allocation1 [shape = 'u32[144,128]{1,0:T(1,128)}', space=vmem, size = 0x12000, scoped, tag = 'internal scratch']
  %s0 = inlined_call_operand.vmem [shape: f32[16,32], index: 0, kind: input, shape index: {}]
  %s1 = inlined_call_operand.hbm [shape: bf16[32,384], index: 1, kind: input, shape index: {}]
  %s2 = inlined_call_operand.hbm [shape: f32[1,384], index: 2, kind: input, shape index: {}]
  %s3 = inlined_call_operand.hbm [shape: bf16[384,512], index: 3, kind: input, shape index: {}]
  %s4 = inlined_call_operand.hbm [shape: f32[1,512], index: 4, kind: input, shape index: {}]
  %s5 = inlined_call_operand.hbm [shape: bf16[512,384], index: 5, kind: input, shape index: {}]
  %s6 = inlined_call_operand.hbm [shape: f32[1,384], index: 6, kind: input, shape index: {}]
  %s7 = inlined_call_operand.hbm [shape: bf16[384,128], index: 7, kind: input, shape index: {}]
  %s8 = inlined_call_operand.vmem [shape: f32[1,128], index: 8, kind: input, shape index: {}]
  %s9 = inlined_call_operand.hbm [shape: bf16[128,128], index: 9, kind: input, shape index: {}]
  %s10 = inlined_call_operand.vmem [shape: f32[1,128], index: 10, kind: input, shape index: {}]
  %s11 = inlined_call_operand.vmem [shape: bf16[128,128], index: 11, kind: input, shape index: {}]
  %s12 = inlined_call_operand.vmem [shape: f32[1,128], index: 12, kind: input, shape index: {}]
  %s13 = inlined_call_operand.vmem [shape: bf16[16,128], index: 13, kind: output, shape index: {}]
  %s14 = sld [smem:[#allocation0]]
  $region94: #{linear_net_forward.1} parent=0
    _
  %s16 = ssub.s32 1, %s14
  %s17 = scalar_select 0, %s16, %s14
  $region1: #{linear_net_forward.1} parent=0
    #allocation2 [shape = 'u8[24576]{0}', space=vmem, size = 0x6000, scoped, tag = 'input window, operand 1, single buffered']
    #allocation3 [shape = 's32[1]{0}', space=sflag, size = 0x4, scoped, tag = 'scoped memory for linear_net_forward.1']
    #allocation4 [shape = 'u8[1536]{0}', space=vmem, size = 0x800, scoped, tag = 'input window, operand 2, single buffered']
    #allocation5 [shape = 's32[1]{0}', space=sflag, size = 0x4, scoped, tag = 'scoped memory for linear_net_forward.1']
    #allocation6 [shape = 'u8[393216]{0}', space=vmem, size = 0x60000, scoped, tag = 'input window, operand 3, single buffered']
    #allocation7 [shape = 'u8[2048]{0}', space=vmem, size = 0x800, scoped, tag = 'input window, operand 4, single buffered']
    #allocation8 [shape = 's32[1]{0}', space=sflag, size = 0x4, scoped, tag = 'scoped memory for linear_net_forward.1']
    #allocation9 [shape = 'u8[393216]{0}', space=vmem, size = 0x60000, scoped, tag = 'input window, operand 5, single buffered']
    #allocation10 [shape = 'u8[1536]{0}', space=vmem, size = 0x800, scoped, tag = 'input window, operand 6, single buffered']
    #allocation11 [shape = 's32[1]{0}', space=sflag, size = 0x4, scoped, tag = 'scoped memory for linear_net_forward.1']
    #allocation12 [shape = 'u8[98304]{0}', space=vmem, size = 0x18000, scoped, tag = 'input window, operand 7, single buffered']
    #allocation13 [shape = 'u8[32768]{0}', space=vmem, size = 0x8000, scoped, tag = 'input window, operand 9, single buffered']
    #allocation14 [shape = 's32[1]{0}', space=sflag, size = 0x4, scoped, tag = 'scoped memory for linear_net_forward.1']
    %18 = vsyncpa [#allocation3], 0
    %19 = vsyncpa [#allocation5], 0
    %20 = vsyncpa [#allocation8], 0
    %21 = vsyncpa [#allocation11], 0
    %22 = vsyncpa [#allocation14], 0
    // Predicated region
    $region2: #{linear_net_forward.1} parent=1 // pred_check
      _
    $region3: #{linear_net_forward.1} parent=1 // pred_check_branch
      %24 = sbr.rel (0) target = $region5
    $region4: #{linear_net_forward.1} parent=1 // pred_region
      _
    $region5: #{linear_net_forward.1} parent=1 // pred_fallthru
      _
    // Predicated region
    $region6: #{linear_net_forward.1} parent=1 // pred_check
      _
    $region7: #{linear_net_forward.1} parent=1 // pred_check_branch
      %26 = sbr.rel (0) target = $region9
    $region8: #{linear_net_forward.1} parent=1 // pred_region
      %s28 = ssub.s32 768, 768
      %29 = vsyncadd [#allocation3], %s28
      %s30 = sshll.u32 [#allocation2], 4
      %s31 = int_to_ptr.vmem [resolvable:$true] %s30
      %36 = dma.hbm_to_vmem [thread:$0]  %s1, 768, %s31, [#allocation3], 192, 192, 12
    $region9: #{linear_net_forward.1} parent=1 // pred_fallthru
      _
    // Predicated region
    $region10: #{linear_net_forward.1} parent=1 // pred_check
      _
    $region11: #{linear_net_forward.1} parent=1 // pred_check_branch
      %38 = sbr.rel (0) target = $region13
    $region12: #{linear_net_forward.1} parent=1 // pred_region
      %s40 = ssub.s32 48, 48
      %41 = vsyncadd [#allocation5], %s40
      %s43 = sshll.u32 [#allocation4], 4
      %s44 = int_to_ptr.vmem [resolvable:$true] %s43
      %46 = dma.hbm_to_vmem [thread:$0]  %s2, 48, %s44, [#allocation5]
    $region13: #{linear_net_forward.1} parent=1 // pred_fallthru
      _
    // Predicated region
    $region14: #{linear_net_forward.1} parent=1 // pred_check
      _
    $region15: #{linear_net_forward.1} parent=1 // pred_check_branch
      %48 = sbr.rel (0) target = $region17
    $region16: #{linear_net_forward.1} parent=1 // pred_region
      %s50 = ssub.s32 12288, 12288
      %51 = vsyncadd [#allocation5], %s50
      %s52 = sshll.u32 [#allocation6], 4
      %s53 = int_to_ptr.vmem [resolvable:$true] %s52
      %58 = dma.hbm_to_vmem [thread:$0]  %s3, 12288, %s53, [#allocation5], 256, 256, 16
    $region17: #{linear_net_forward.1} parent=1 // pred_fallthru
      _
    // Predicated region
    $region18: #{linear_net_forward.1} parent=1 // pred_check
      _
    $region19: #{linear_net_forward.1} parent=1 // pred_check_branch
      %60 = sbr.rel (0) target = $region21
    $region20: #{linear_net_forward.1} parent=1 // pred_region
      %s62 = ssub.s32 64, 64
      %63 = vsyncadd [#allocation8], %s62
      %s65 = sshll.u32 [#allocation7], 4
      %s66 = int_to_ptr.vmem [resolvable:$true] %s65
      %68 = dma.hbm_to_vmem [thread:$0]  %s4, 64, %s66, [#allocation8]
    $region21: #{linear_net_forward.1} parent=1 // pred_fallthru
      _
    // Predicated region
    $region22: #{linear_net_forward.1} parent=1 // pred_check
      _
    $region23: #{linear_net_forward.1} parent=1 // pred_check_branch
      %70 = sbr.rel (0) target = $region25
    $region24: #{linear_net_forward.1} parent=1 // pred_region
      %s72 = ssub.s32 12288, 12288
      %73 = vsyncadd [#allocation8], %s72
      %s74 = sshll.u32 [#allocation9], 4
      %s75 = int_to_ptr.vmem [resolvable:$true] %s74
      %80 = dma.hbm_to_vmem [thread:$0]  %s5, 12288, %s75, [#allocation8], 192, 192, 12
    $region25: #{linear_net_forward.1} parent=1 // pred_fallthru
      _
    // Predicated region
    $region26: #{linear_net_forward.1} parent=1 // pred_check
      _
    $region27: #{linear_net_forward.1} parent=1 // pred_check_branch
      %82 = sbr.rel (0) target = $region29
    $region28: #{linear_net_forward.1} parent=1 // pred_region
      %s84 = ssub.s32 48, 48
      %85 = vsyncadd [#allocation11], %s84
      %s87 = sshll.u32 [#allocation10], 4
      %s88 = int_to_ptr.vmem [resolvable:$true] %s87
      %90 = dma.hbm_to_vmem [thread:$0]  %s6, 48, %s88, [#allocation11]
    $region29: #{linear_net_forward.1} parent=1 // pred_fallthru
      _
    // Predicated region
    $region30: #{linear_net_forward.1} parent=1 // pred_check
      _
    $region31: #{linear_net_forward.1} parent=1 // pred_check_branch
      %92 = sbr.rel (0) target = $region33
    $region32: #{linear_net_forward.1} parent=1 // pred_region
      %s94 = ssub.s32 3072, 3072
      %95 = vsyncadd [#allocation11], %s94
      %s96 = sshll.u32 [#allocation12], 4
      %s97 = int_to_ptr.vmem [resolvable:$true] %s96
      %102 = dma.hbm_to_vmem [thread:$0]  %s7, 3072, %s97, [#allocation11], 64, 64, 4
    $region33: #{linear_net_forward.1} parent=1 // pred_fallthru
      _
    // Predicated region
    $region34: #{linear_net_forward.1} parent=1 // pred_check
      _
    $region35: #{linear_net_forward.1} parent=1 // pred_check_branch
      %104 = sbr.rel (0) target = $region37
    $region36: #{linear_net_forward.1} parent=1 // pred_region
      _
    $region37: #{linear_net_forward.1} parent=1 // pred_fallthru
      _
    // Predicated region
    $region38: #{linear_net_forward.1} parent=1 // pred_check
      _
    $region39: #{linear_net_forward.1} parent=1 // pred_check_branch
      %106 = sbr.rel (0) target = $region41
    $region40: #{linear_net_forward.1} parent=1 // pred_region
      %s108 = ssub.s32 1024, 1024
      %109 = vsyncadd [#allocation14], %s108
      %s110 = sshll.u32 [#allocation13], 4
      %s111 = int_to_ptr.vmem [resolvable:$true] %s110
      %116 = dma.hbm_to_vmem [thread:$0]  %s9, 1024, %s111, [#allocation14], 64, 64, 4
    $region41: #{linear_net_forward.1} parent=1 // pred_fallthru
      _
    // Predicated region
    $region42: #{linear_net_forward.1} parent=1 // pred_check
      _
    $region43: #{linear_net_forward.1} parent=1 // pred_check_branch
      %118 = sbr.rel (0) target = $region45
    $region44: #{linear_net_forward.1} parent=1 // pred_region
      _
    $region45: #{linear_net_forward.1} parent=1 // pred_fallthru
      _
    // Predicated region
    $region46: #{linear_net_forward.1} parent=1 // pred_check
      _
    $region47: #{linear_net_forward.1} parent=1 // pred_check_branch
      %120 = sbr.rel (0) target = $region49
    $region48: #{linear_net_forward.1} parent=1 // pred_region
      _
    $region49: #{linear_net_forward.1} parent=1 // pred_fallthru
      _
    // Predicated region
    $region50: #{linear_net_forward.1} parent=1 // pred_check
      _
    $region51: #{linear_net_forward.1} parent=1 // pred_check_branch
      %122 = sbr.rel (0) target = $region53
    $region52: #{linear_net_forward.1} parent=1 // pred_region
      _
    $region53: #{linear_net_forward.1} parent=1 // pred_fallthru
      _
    // Predicated region
    $region54: #{linear_net_forward.1} parent=1 // pred_check
      _
    $region55: #{linear_net_forward.1} parent=1 // pred_check_branch
      %124 = sbr.rel (0) target = $region57
    $region56: #{linear_net_forward.1} parent=1 // pred_region
      %125 = dma.done [#allocation3], 768
    $region57: #{linear_net_forward.1} parent=1 // pred_fallthru
      _
    // Predicated region
    $region58: #{linear_net_forward.1} parent=1 // pred_check
      _
    $region59: #{linear_net_forward.1} parent=1 // pred_check_branch
      %127 = sbr.rel (0) target = $region61
    $region60: #{linear_net_forward.1} parent=1 // pred_region
      %128 = dma.done [#allocation5], 48
    $region61: #{linear_net_forward.1} parent=1 // pred_fallthru
      _
    // Predicated region
    $region62: #{linear_net_forward.1} parent=1 // pred_check
      _
    $region63: #{linear_net_forward.1} parent=1 // pred_check_branch
      %130 = sbr.rel (0) target = $region65
    $region64: #{linear_net_forward.1} parent=1 // pred_region
      %131 = dma.done [#allocation5], 12288
    $region65: #{linear_net_forward.1} parent=1 // pred_fallthru
      _
    // Predicated region
    $region66: #{linear_net_forward.1} parent=1 // pred_check
      _
    $region67: #{linear_net_forward.1} parent=1 // pred_check_branch
      %133 = sbr.rel (0) target = $region69
    $region68: #{linear_net_forward.1} parent=1 // pred_region
      %134 = dma.done [#allocation8], 64
    $region69: #{linear_net_forward.1} parent=1 // pred_fallthru
      _
    // Predicated region
    $region70: #{linear_net_forward.1} parent=1 // pred_check
      _
    $region71: #{linear_net_forward.1} parent=1 // pred_check_branch
      %136 = sbr.rel (0) target = $region73
    $region72: #{linear_net_forward.1} parent=1 // pred_region
      %137 = dma.done [#allocation8], 12288
    $region73: #{linear_net_forward.1} parent=1 // pred_fallthru
      _
    // Predicated region
    $region74: #{linear_net_forward.1} parent=1 // pred_check
      _
    $region75: #{linear_net_forward.1} parent=1 // pred_check_branch
      %139 = sbr.rel (0) target = $region77
    $region76: #{linear_net_forward.1} parent=1 // pred_region
      %140 = dma.done [#allocation11], 48
    $region77: #{linear_net_forward.1} parent=1 // pred_fallthru
      _
    // Predicated region
    $region78: #{linear_net_forward.1} parent=1 // pred_check
      _
    $region79: #{linear_net_forward.1} parent=1 // pred_check_branch
      %142 = sbr.rel (0) target = $region81
    $region80: #{linear_net_forward.1} parent=1 // pred_region
      %143 = dma.done [#allocation11], 3072
    $region81: #{linear_net_forward.1} parent=1 // pred_fallthru
      _
    // Predicated region
    $region82: #{linear_net_forward.1} parent=1 // pred_check
      _
    $region83: #{linear_net_forward.1} parent=1 // pred_check_branch
      %145 = sbr.rel (0) target = $region85
    $region84: #{linear_net_forward.1} parent=1 // pred_region
      %146 = dma.done [#allocation14], 1024
    $region85: #{linear_net_forward.1} parent=1 // pred_fallthru
      _
    %v148 = vld [vmem:[%s0] sm:$0xff]
    %v149 = vld [vmem:[%s0 + $0x8] sm:$0xff]
    %v150 = vpack.c.bf16 %v149, %v148
    %v151 = vld [vmem:[#allocation2] sm:$0xff]
    %v152 = vld [vmem:[#allocation2 + $0x8] sm:$0xf]
    %v153 = vld [vmem:[#allocation2 + $0xc] sm:$0xff]
    %v154 = vld [vmem:[#allocation2 + $0x14] sm:$0xf]
    %v155 = vld [vmem:[#allocation2 + $0x18] sm:$0xff]
    %v156 = vld [vmem:[#allocation2 + $0x20] sm:$0xf]
    %v157 = vld [vmem:[#allocation2 + $0x24] sm:$0xff]
    %v158 = vld [vmem:[#allocation2 + $0x2c] sm:$0xf]
    %v167 = vunpack.c.l.b16 %v151
    %v168 = vunpack.c.h.b16 %v151
    %v169 = vunpack.c.l.b16 %v152
    %v170 = vunpack.c.l.b16 %v153
    %v171 = vunpack.c.h.b16 %v153
    %v172 = vunpack.c.l.b16 %v154
    %v173 = vunpack.c.l.b16 %v155
    %v174 = vunpack.c.h.b16 %v155
    %v175 = vunpack.c.l.b16 %v156
    %v176 = vunpack.c.l.b16 %v157
    %v177 = vunpack.c.h.b16 %v157
    %v178 = vunpack.c.l.b16 %v158
    %v179 = vpack.c.b16 %v170, %v167
    %v180 = vpack.c.b16 %v171, %v168
    %v181 = vpack.c.b16 %v172, %v169
    %v182 = vpack.c.b16 %v176, %v173
    %v183 = vpack.c.b16 %v177, %v174
    %v184 = vpack.c.b16 %v178, %v175
    %vm191 = vcmask 261120
    %v193 = vsel %vm191, %v150, 0
    %195 = vmatprep.subr.bf16.mxu0 %v180
    %196 = vmatpush1.bf16.msra.mxu0 %v179
    %197 = vmatprep.subr.bf16.mxu0 %v183
    %198 = vmatpush1.bf16.msra.mxu0 %v182
    %199 = vmatprep.subr.bf16.mxu0 0
    %200 = vmatpush1.bf16.msra.mxu0 0
    %201 = vmatprep.subr.bf16.mxu0 0
    %202 = vmatpush1.bf16.msra.mxu0 0
    %203 = vmatprep.subr.bf16.mxu0 0
    %204 = vmatpush1.bf16.msra.mxu0 0
    %205 = vmatprep.subr.bf16.mxu0 0
    %206 = vmatpush1.bf16.msra.mxu0 0
    %207 = vmatprep.subr.bf16.mxu0 0
    %208 = vmatpush1.bf16.msra.mxu0 0
    %209 = vmatprep.subr.bf16.mxu0 0
    %210 = vmatpush1.bf16.msra.mxu0 0
    %211 = vmatprep.subr.bf16.mxu0 0
    %212 = vmatpush1.bf16.msra.mxu0 0
    %213 = vmatprep.subr.bf16.mxu0 0
    %214 = vmatpush1.bf16.msra.mxu0 0
    %215 = vmatprep.subr.bf16.mxu0 0
    %216 = vmatpush1.bf16.msra.mxu0 0
    %217 = vmatprep.subr.bf16.mxu0 0
    %218 = vmatpush1.bf16.msra.mxu0 0
    %219 = vmatprep.subr.bf16.mxu0 0
    %220 = vmatpush1.bf16.msra.mxu0 0
    %221 = vmatprep.subr.bf16.mxu0 0
    %222 = vmatpush1.bf16.msra.mxu0 0
    %223 = vmatprep.subr.bf16.mxu0 0
    %224 = vmatpush1.bf16.msra.mxu0 0
    %225 = vmatprep.subr.bf16.mxu0 0
    %226 = vmatpush1.bf16.msra.mxu0 0
    %227 = vmatprep.mubr.bf16.mxu0 0
    %228 = vmatmul.mubr.bf16.gmra.mrb[0].mxu0 %v193
    %v229 = vpop.f32.mrb[0].mxu0
    %v230 = vadd.f32 0.0, %v229
    %v231 = vpop.f32.mrb[0].mxu0
    %v232 = vadd.f32 0.0, %v231
    %v233 = vpop.f32.mrb[0].mxu0
    %v234 = vadd.f32 0.0, %v233
    %v235 = vpop.f32.mrb[0].mxu0
    %v236 = vadd.f32 0.0, %v235
    %237 = vdwg.mxu0
    %238 = vmatprep.subr.bf16.mxu0 0
    %239 = vmatpush1.bf16.msra.mxu0 %v181
    %240 = vmatprep.subr.bf16.mxu0 0
    %241 = vmatpush1.bf16.msra.mxu0 %v184
    %242 = vmatprep.subr.bf16.mxu0 0
    %243 = vmatpush1.bf16.msra.mxu0 0
    %244 = vmatprep.subr.bf16.mxu0 0
    %245 = vmatpush1.bf16.msra.mxu0 0
    %246 = vmatprep.subr.bf16.mxu0 0
    %247 = vmatpush1.bf16.msra.mxu0 0
    %248 = vmatprep.subr.bf16.mxu0 0
    %249 = vmatpush1.bf16.msra.mxu0 0
    %250 = vmatprep.subr.bf16.mxu0 0
    %251 = vmatpush1.bf16.msra.mxu0 0
    %252 = vmatprep.subr.bf16.mxu0 0
    %253 = vmatpush1.bf16.msra.mxu0 0
    %254 = vmatprep.subr.bf16.mxu0 0
    %255 = vmatpush1.bf16.msra.mxu0 0
    %256 = vmatprep.subr.bf16.mxu0 0
    %257 = vmatpush1.bf16.msra.mxu0 0
    %258 = vmatprep.subr.bf16.mxu0 0
    %259 = vmatpush1.bf16.msra.mxu0 0
    %260 = vmatprep.subr.bf16.mxu0 0
    %261 = vmatpush1.bf16.msra.mxu0 0
    %262 = vmatprep.subr.bf16.mxu0 0
    %263 = vmatpush1.bf16.msra.mxu0 0
    %264 = vmatprep.subr.bf16.mxu0 0
    %265 = vmatpush1.bf16.msra.mxu0 0
    %266 = vmatprep.subr.bf16.mxu0 0
    %267 = vmatpush1.bf16.msra.mxu0 0
    %268 = vmatprep.subr.bf16.mxu0 0
    %269 = vmatpush1.bf16.msra.mxu0 0
    %270 = vmatprep.mubr.bf16.mxu0 0
    %271 = vmatmul.mubr.bf16.gmra.mrb[0].mxu0 %v193
    %v272 = vpop.f32.mrb[0].mxu0
    %v273 = vadd.f32 0.0, %v272
    %v274 = vpop.f32.mrb[0].mxu0
    %v275 = vpop.f32.mrb[0].mxu0
    %v276 = vadd.f32 0.0, %v275
    %v277 = vpop.f32.mrb[0].mxu0
    %278 = vdwg.mxu0
    %v279 = vpack.c.bf16 %v234, %v230
    %v280 = vpack.c.bf16 %v236, %v232
    %v281 = vpack.c.bf16 %v276, %v273
    %v282 = vld [vmem:[#allocation4] sm:$0x7]
    %v284 = vlaneseq
    %v285 = vshrl.u32 %v284, 7
    %v286 = vsub.s32 0, %v285
    %v287 = vrot.slane %v282, %v286
    %v288 = vlaneseq
    %v289 = vshrl.u32 %v288, 7
    %v290 = vsub.s32 1, %v289
    %v291 = vrot.slane %v282, %v290
    %v292 = vlaneseq
    %v293 = vshrl.u32 %v292, 7
    %v294 = vsub.s32 2, %v293
    %v295 = vrot.slane %v282, %v294
    %v299 = vpack.c.bf16 %v287, %v287
    %v300 = vpack.c.bf16 %v291, %v291
    %v301 = vpack.c.bf16 %v295, %v295
    %v303 = vpack.i.b16 %v299, %v299
    %v305 = vlaneseq
    %v306 = vshrl.u32 %v305, 7
    %v307 = vsub.s32 0, %v306
    %v308 = vrot.slane %v303, %v307
    %v310 = vpack.i.b16 %v300, %v300
    %v312 = vlaneseq
    %v313 = vshrl.u32 %v312, 7
    %v314 = vsub.s32 0, %v313
    %v315 = vrot.slane %v310, %v314
    %v317 = vpack.i.b16 %v301, %v301
    %v319 = vlaneseq
    %v320 = vshrl.u32 %v319, 7
    %v321 = vsub.s32 0, %v320
    %v322 = vrot.slane %v317, %v321
    %v323 = vadd.bf16 %v279, %v308
    %v324 = vadd.bf16 %v280, %v315
    %v325 = vadd.bf16 %v281, %v322
    %v326 = vmax.bf16 %v323, 0
    %v327 = vmax.bf16 %v324, 0
    %v328 = vmax.bf16 %v325, 0
    %v329 = vld [vmem:[#allocation6] sm:$0xff]
    %v330 = vld [vmem:[#allocation6 + $0x8] sm:$0xff]
    %v331 = vld [vmem:[#allocation6 + $0x10] sm:$0xff]
    %v332 = vld [vmem:[#allocation6 + $0x18] sm:$0xff]
    %v333 = vld [vmem:[#allocation6 + $0x20] sm:$0xff]
    %v334 = vld [vmem:[#allocation6 + $0x28] sm:$0xff]
    %v335 = vld [vmem:[#allocation6 + $0x30] sm:$0xff]
    %v336 = vld [vmem:[#allocation6 + $0x38] sm:$0xff]
    %v337 = vld [vmem:[#allocation6 + $0x40] sm:$0xff]
    %v338 = vld [vmem:[#allocation6 + $0x48] sm:$0xff]
    %v339 = vld [vmem:[#allocation6 + $0x50] sm:$0xff]
    %v340 = vld [vmem:[#allocation6 + $0x58] sm:$0xff]
    %v341 = vld [vmem:[#allocation6 + $0x60] sm:$0xff]
    %v342 = vld [vmem:[#allocation6 + $0x68] sm:$0xff]
    %v343 = vld [vmem:[#allocation6 + $0x70] sm:$0xff]
    %v344 = vld [vmem:[#allocation6 + $0x78] sm:$0xff]
    %v345 = vld [vmem:[#allocation6 + $0x80] sm:$0xff]
    %v346 = vld [vmem:[#allocation6 + $0x88] sm:$0xff]
    %v347 = vld [vmem:[#allocation6 + $0x90] sm:$0xff]
    %v348 = vld [vmem:[#allocation6 + $0x98] sm:$0xff]
    %v349 = vld [vmem:[#allocation6 + $0xa0] sm:$0xff]
    %v350 = vld [vmem:[#allocation6 + $0xa8] sm:$0xff]
    %v351 = vld [vmem:[#allocation6 + $0xb0] sm:$0xff]
    %v352 = vld [vmem:[#allocation6 + $0xb8] sm:$0xff]
    %v353 = vld [vmem:[#allocation6 + $0xc0] sm:$0xff]
    %v354 = vld [vmem:[#allocation6 + $0xc8] sm:$0xff]
    %v355 = vld [vmem:[#allocation6 + $0xd0] sm:$0xff]
    %v356 = vld [vmem:[#allocation6 + $0xd8] sm:$0xff]
    %v357 = vld [vmem:[#allocation6 + $0xe0] sm:$0xff]
    %v358 = vld [vmem:[#allocation6 + $0xe8] sm:$0xff]
    %v359 = vld [vmem:[#allocation6 + $0xf0] sm:$0xff]
    %v360 = vld [vmem:[#allocation6 + $0xf8] sm:$0xff]
    %v361 = vld [vmem:[#allocation6 + $0x100] sm:$0xff]
    %v362 = vld [vmem:[#allocation6 + $0x108] sm:$0xff]
    %v363 = vld [vmem:[#allocation6 + $0x110] sm:$0xff]
    %v364 = vld [vmem:[#allocation6 + $0x118] sm:$0xff]
    %v365 = vld [vmem:[#allocation6 + $0x120] sm:$0xff]
    %v366 = vld [vmem:[#allocation6 + $0x128] sm:$0xff]
    %v367 = vld [vmem:[#allocation6 + $0x130] sm:$0xff]
    %v368 = vld [vmem:[#allocation6 + $0x138] sm:$0xff]
    %v369 = vld [vmem:[#allocation6 + $0x140] sm:$0xff]
    %v370 = vld [vmem:[#allocation6 + $0x148] sm:$0xff]
    %v371 = vld [vmem:[#allocation6 + $0x150] sm:$0xff]
    %v372 = vld [vmem:[#allocation6 + $0x158] sm:$0xff]
    %v373 = vld [vmem:[#allocation6 + $0x160] sm:$0xff]
    %v374 = vld [vmem:[#allocation6 + $0x168] sm:$0xff]
    %v375 = vld [vmem:[#allocation6 + $0x170] sm:$0xff]
    %v376 = vld [vmem:[#allocation6 + $0x178] sm:$0xff]
    %v377 = vld [vmem:[#allocation6 + $0x180] sm:$0xff]
    %v378 = vld [vmem:[#allocation6 + $0x188] sm:$0xff]
    %v379 = vld [vmem:[#allocation6 + $0x190] sm:$0xff]
    %v380 = vld [vmem:[#allocation6 + $0x198] sm:$0xff]
    %v381 = vld [vmem:[#allocation6 + $0x1a0] sm:$0xff]
    %v382 = vld [vmem:[#allocation6 + $0x1a8] sm:$0xff]
    %v383 = vld [vmem:[#allocation6 + $0x1b0] sm:$0xff]
    %v384 = vld [vmem:[#allocation6 + $0x1b8] sm:$0xff]
    %v385 = vld [vmem:[#allocation6 + $0x1c0] sm:$0xff]
    %v386 = vld [vmem:[#allocation6 + $0x1c8] sm:$0xff]
    %v387 = vld [vmem:[#allocation6 + $0x1d0] sm:$0xff]
    %v388 = vld [vmem:[#allocation6 + $0x1d8] sm:$0xff]
    %v389 = vld [vmem:[#allocation6 + $0x1e0] sm:$0xff]
    %v390 = vld [vmem:[#allocation6 + $0x1e8] sm:$0xff]
    %v391 = vld [vmem:[#allocation6 + $0x1f0] sm:$0xff]
    %v392 = vld [vmem:[#allocation6 + $0x1f8] sm:$0xff]
    %v393 = vld [vmem:[#allocation6 + $0x200] sm:$0xff]
    %v394 = vld [vmem:[#allocation6 + $0x208] sm:$0xff]
    %v395 = vld [vmem:[#allocation6 + $0x210] sm:$0xff]
    %v396 = vld [vmem:[#allocation6 + $0x218] sm:$0xff]
    %v397 = vld [vmem:[#allocation6 + $0x220] sm:$0xff]
    %v398 = vld [vmem:[#allocation6 + $0x228] sm:$0xff]
    %v399 = vld [vmem:[#allocation6 + $0x230] sm:$0xff]
    %v400 = vld [vmem:[#allocation6 + $0x238] sm:$0xff]
    %v401 = vld [vmem:[#allocation6 + $0x240] sm:$0xff]
    %v402 = vld [vmem:[#allocation6 + $0x248] sm:$0xff]
    %v403 = vld [vmem:[#allocation6 + $0x250] sm:$0xff]
    %v404 = vld [vmem:[#allocation6 + $0x258] sm:$0xff]
    %v405 = vld [vmem:[#allocation6 + $0x260] sm:$0xff]
    %v406 = vld [vmem:[#allocation6 + $0x268] sm:$0xff]
    %v407 = vld [vmem:[#allocation6 + $0x270] sm:$0xff]
    %v408 = vld [vmem:[#allocation6 + $0x278] sm:$0xff]
    %v409 = vld [vmem:[#allocation6 + $0x280] sm:$0xff]
    %v410 = vld [vmem:[#allocation6 + $0x288] sm:$0xff]
    %v411 = vld [vmem:[#allocation6 + $0x290] sm:$0xff]
    %v412 = vld [vmem:[#allocation6 + $0x298] sm:$0xff]
    %v413 = vld [vmem:[#allocation6 + $0x2a0] sm:$0xff]
    %v414 = vld [vmem:[#allocation6 + $0x2a8] sm:$0xff]
    %v415 = vld [vmem:[#allocation6 + $0x2b0] sm:$0xff]
    %v416 = vld [vmem:[#allocation6 + $0x2b8] sm:$0xff]
    %v417 = vld [vmem:[#allocation6 + $0x2c0] sm:$0xff]
    %v418 = vld [vmem:[#allocation6 + $0x2c8] sm:$0xff]
    %v419 = vld [vmem:[#allocation6 + $0x2d0] sm:$0xff]
    %v420 = vld [vmem:[#allocation6 + $0x2d8] sm:$0xff]
    %v421 = vld [vmem:[#allocation6 + $0x2e0] sm:$0xff]
    %v422 = vld [vmem:[#allocation6 + $0x2e8] sm:$0xff]
    %v423 = vld [vmem:[#allocation6 + $0x2f0] sm:$0xff]
    %v424 = vld [vmem:[#allocation6 + $0x2f8] sm:$0xff]
    %v521 = vunpack.c.l.b16 %v329
    %v522 = vunpack.c.h.b16 %v329
    %v523 = vunpack.c.l.b16 %v330
    %v524 = vunpack.c.h.b16 %v330
    %v525 = vunpack.c.l.b16 %v331
    %v526 = vunpack.c.h.b16 %v331
    %v527 = vunpack.c.l.b16 %v332
    %v528 = vunpack.c.h.b16 %v332
    %v529 = vunpack.c.l.b16 %v333
    %v530 = vunpack.c.h.b16 %v333
    %v531 = vunpack.c.l.b16 %v334
    %v532 = vunpack.c.h.b16 %v334
    %v533 = vunpack.c.l.b16 %v335
    %v534 = vunpack.c.h.b16 %v335
    %v535 = vunpack.c.l.b16 %v336
    %v536 = vunpack.c.h.b16 %v336
    %v537 = vunpack.c.l.b16 %v337
    %v538 = vunpack.c.h.b16 %v337
    %v539 = vunpack.c.l.b16 %v338
    %v540 = vunpack.c.h.b16 %v338
    %v541 = vunpack.c.l.b16 %v339
    %v542 = vunpack.c.h.b16 %v339
    %v543 = vunpack.c.l.b16 %v340
    %v544 = vunpack.c.h.b16 %v340
    %v545 = vunpack.c.l.b16 %v341
    %v546 = vunpack.c.h.b16 %v341
    %v547 = vunpack.c.l.b16 %v342
    %v548 = vunpack.c.h.b16 %v342
    %v549 = vunpack.c.l.b16 %v343
    %v550 = vunpack.c.h.b16 %v343
    %v551 = vunpack.c.l.b16 %v344
    %v552 = vunpack.c.h.b16 %v344
    %v553 = vunpack.c.l.b16 %v345
    %v554 = vunpack.c.h.b16 %v345
    %v555 = vunpack.c.l.b16 %v346
    %v556 = vunpack.c.h.b16 %v346
    %v557 = vunpack.c.l.b16 %v347
    %v558 = vunpack.c.h.b16 %v347
    %v559 = vunpack.c.l.b16 %v348
    %v560 = vunpack.c.h.b16 %v348
    %v561 = vunpack.c.l.b16 %v349
    %v562 = vunpack.c.h.b16 %v349
    %v563 = vunpack.c.l.b16 %v350
    %v564 = vunpack.c.h.b16 %v350
    %v565 = vunpack.c.l.b16 %v351
    %v566 = vunpack.c.h.b16 %v351
    %v567 = vunpack.c.l.b16 %v352
    %v568 = vunpack.c.h.b16 %v352
    %v569 = vunpack.c.l.b16 %v353
    %v570 = vunpack.c.h.b16 %v353
    %v571 = vunpack.c.l.b16 %v354
    %v572 = vunpack.c.h.b16 %v354
    %v573 = vunpack.c.l.b16 %v355
    %v574 = vunpack.c.h.b16 %v355
    %v575 = vunpack.c.l.b16 %v356
    %v576 = vunpack.c.h.b16 %v356
    %v577 = vunpack.c.l.b16 %v357
    %v578 = vunpack.c.h.b16 %v357
    %v579 = vunpack.c.l.b16 %v358
    %v580 = vunpack.c.h.b16 %v358
    %v581 = vunpack.c.l.b16 %v359
    %v582 = vunpack.c.h.b16 %v359
    %v583 = vunpack.c.l.b16 %v360
    %v584 = vunpack.c.h.b16 %v360
    %v585 = vunpack.c.l.b16 %v361
    %v586 = vunpack.c.h.b16 %v361
    %v587 = vunpack.c.l.b16 %v362
    %v588 = vunpack.c.h.b16 %v362
    %v589 = vunpack.c.l.b16 %v363
    %v590 = vunpack.c.h.b16 %v363
    %v591 = vunpack.c.l.b16 %v364
    %v592 = vunpack.c.h.b16 %v364
    %v593 = vunpack.c.l.b16 %v365
    %v594 = vunpack.c.h.b16 %v365
    %v595 = vunpack.c.l.b16 %v366
    %v596 = vunpack.c.h.b16 %v366
    %v597 = vunpack.c.l.b16 %v367
    %v598 = vunpack.c.h.b16 %v367
    %v599 = vunpack.c.l.b16 %v368
    %v600 = vunpack.c.h.b16 %v368
    %v601 = vunpack.c.l.b16 %v369
    %v602 = vunpack.c.h.b16 %v369
    %v603 = vunpack.c.l.b16 %v370
    %v604 = vunpack.c.h.b16 %v370
    %v605 = vunpack.c.l.b16 %v371
    %v606 = vunpack.c.h.b16 %v371
    %v607 = vunpack.c.l.b16 %v372
    %v608 = vunpack.c.h.b16 %v372
    %v609 = vunpack.c.l.b16 %v373
    %v610 = vunpack.c.h.b16 %v373
    %v611 = vunpack.c.l.b16 %v374
    %v612 = vunpack.c.h.b16 %v374
    %v613 = vunpack.c.l.b16 %v375
    %v614 = vunpack.c.h.b16 %v375
    %v615 = vunpack.c.l.b16 %v376
    %v616 = vunpack.c.h.b16 %v376
    %v617 = vunpack.c.l.b16 %v377
    %v618 = vunpack.c.h.b16 %v377
    %v619 = vunpack.c.l.b16 %v378
    %v620 = vunpack.c.h.b16 %v378
    %v621 = vunpack.c.l.b16 %v379
    %v622 = vunpack.c.h.b16 %v379
    %v623 = vunpack.c.l.b16 %v380
    %v624 = vunpack.c.h.b16 %v380
    %v625 = vunpack.c.l.b16 %v381
    %v626 = vunpack.c.h.b16 %v381
    %v627 = vunpack.c.l.b16 %v382
    %v628 = vunpack.c.h.b16 %v382
    %v629 = vunpack.c.l.b16 %v383
    %v630 = vunpack.c.h.b16 %v383
    %v631 = vunpack.c.l.b16 %v384
    %v632 = vunpack.c.h.b16 %v384
    %v633 = vunpack.c.l.b16 %v385
    %v634 = vunpack.c.h.b16 %v385
    %v635 = vunpack.c.l.b16 %v386
    %v636 = vunpack.c.h.b16 %v386
    %v637 = vunpack.c.l.b16 %v387
    %v638 = vunpack.c.h.b16 %v387
    %v639 = vunpack.c.l.b16 %v388
    %v640 = vunpack.c.h.b16 %v388
    %v641 = vunpack.c.l.b16 %v389
    %v642 = vunpack.c.h.b16 %v389
    %v643 = vunpack.c.l.b16 %v390
    %v644 = vunpack.c.h.b16 %v390
    %v645 = vunpack.c.l.b16 %v391
    %v646 = vunpack.c.h.b16 %v391
    %v647 = vunpack.c.l.b16 %v392
    %v648 = vunpack.c.h.b16 %v392
    %v649 = vunpack.c.l.b16 %v393
    %v650 = vunpack.c.h.b16 %v393
    %v651 = vunpack.c.l.b16 %v394
    %v652 = vunpack.c.h.b16 %v394
    %v653 = vunpack.c.l.b16 %v395
    %v654 = vunpack.c.h.b16 %v395
    %v655 = vunpack.c.l.b16 %v396
    %v656 = vunpack.c.h.b16 %v396
    %v657 = vunpack.c.l.b16 %v397
    %v658 = vunpack.c.h.b16 %v397
    %v659 = vunpack.c.l.b16 %v398
    %v660 = vunpack.c.h.b16 %v398
    %v661 = vunpack.c.l.b16 %v399
    %v662 = vunpack.c.h.b16 %v399
    %v663 = vunpack.c.l.b16 %v400
    %v664 = vunpack.c.h.b16 %v400
    %v665 = vunpack.c.l.b16 %v401
    %v666 = vunpack.c.h.b16 %v401
    %v667 = vunpack.c.l.b16 %v402
    %v668 = vunpack.c.h.b16 %v402
    %v669 = vunpack.c.l.b16 %v403
    %v670 = vunpack.c.h.b16 %v403
    %v671 = vunpack.c.l.b16 %v404
    %v672 = vunpack.c.h.b16 %v404
    %v673 = vunpack.c.l.b16 %v405
    %v674 = vunpack.c.h.b16 %v405
    %v675 = vunpack.c.l.b16 %v406
    %v676 = vunpack.c.h.b16 %v406
    %v677 = vunpack.c.l.b16 %v407
    %v678 = vunpack.c.h.b16 %v407
    %v679 = vunpack.c.l.b16 %v408
    %v680 = vunpack.c.h.b16 %v408
    %v681 = vunpack.c.l.b16 %v409
    %v682 = vunpack.c.h.b16 %v409
    %v683 = vunpack.c.l.b16 %v410
    %v684 = vunpack.c.h.b16 %v410
    %v685 = vunpack.c.l.b16 %v411
    %v686 = vunpack.c.h.b16 %v411
    %v687 = vunpack.c.l.b16 %v412
    %v688 = vunpack.c.h.b16 %v412
    %v689 = vunpack.c.l.b16 %v413
    %v690 = vunpack.c.h.b16 %v413
    %v691 = vunpack.c.l.b16 %v414
    %v692 = vunpack.c.h.b16 %v414
    %v693 = vunpack.c.l.b16 %v415
    %v694 = vunpack.c.h.b16 %v415
    %v695 = vunpack.c.l.b16 %v416
    %v696 = vunpack.c.h.b16 %v416
    %v697 = vunpack.c.l.b16 %v417
    %v698 = vunpack.c.h.b16 %v417
    %v699 = vunpack.c.l.b16 %v418
    %v700 = vunpack.c.h.b16 %v418
    %v701 = vunpack.c.l.b16 %v419
    %v702 = vunpack.c.h.b16 %v419
    %v703 = vunpack.c.l.b16 %v420
    %v704 = vunpack.c.h.b16 %v420
    %v705 = vunpack.c.l.b16 %v421
    %v706 = vunpack.c.h.b16 %v421
    %v707 = vunpack.c.l.b16 %v422
    %v708 = vunpack.c.h.b16 %v422
    %v709 = vunpack.c.l.b16 %v423
    %v710 = vunpack.c.h.b16 %v423
    %v711 = vunpack.c.l.b16 %v424
    %v712 = vunpack.c.h.b16 %v424
    %v713 = vpack.c.b16 %v525, %v521
    %v714 = vpack.c.b16 %v526, %v522
    %v715 = vpack.c.b16 %v527, %v523
    %v716 = vpack.c.b16 %v528, %v524
    %v717 = vpack.c.b16 %v533, %v529
    %v718 = vpack.c.b16 %v534, %v530
    %v719 = vpack.c.b16 %v535, %v531
    %v720 = vpack.c.b16 %v536, %v532
    %v721 = vpack.c.b16 %v541, %v537
    %v722 = vpack.c.b16 %v542, %v538
    %v723 = vpack.c.b16 %v543, %v539
    %v724 = vpack.c.b16 %v544, %v540
    %v725 = vpack.c.b16 %v549, %v545
    %v726 = vpack.c.b16 %v550, %v546
    %v727 = vpack.c.b16 %v551, %v547
    %v728 = vpack.c.b16 %v552, %v548
    %v729 = vpack.c.b16 %v557, %v553
    %v730 = vpack.c.b16 %v558, %v554
    %v731 = vpack.c.b16 %v559, %v555
    %v732 = vpack.c.b16 %v560, %v556
    %v733 = vpack.c.b16 %v565, %v561
    %v734 = vpack.c.b16 %v566, %v562
    %v735 = vpack.c.b16 %v567, %v563
    %v736 = vpack.c.b16 %v568, %v564
    %v737 = vpack.c.b16 %v573, %v569
    %v738 = vpack.c.b16 %v574, %v570
    %v739 = vpack.c.b16 %v575, %v571
    %v740 = vpack.c.b16 %v576, %v572
    %v741 = vpack.c.b16 %v581, %v577
    %v742 = vpack.c.b16 %v582, %v578
    %v743 = vpack.c.b16 %v583, %v579
    %v744 = vpack.c.b16 %v584, %v580
    %v745 = vpack.c.b16 %v589, %v585
    %v746 = vpack.c.b16 %v590, %v586
    %v747 = vpack.c.b16 %v591, %v587
    %v748 = vpack.c.b16 %v592, %v588
    %v749 = vpack.c.b16 %v597, %v593
    %v750 = vpack.c.b16 %v598, %v594
    %v751 = vpack.c.b16 %v599, %v595
    %v752 = vpack.c.b16 %v600, %v596
    %v753 = vpack.c.b16 %v605, %v601
    %v754 = vpack.c.b16 %v606, %v602
    %v755 = vpack.c.b16 %v607, %v603
    %v756 = vpack.c.b16 %v608, %v604
    %v757 = vpack.c.b16 %v613, %v609
    %v758 = vpack.c.b16 %v614, %v610
    %v759 = vpack.c.b16 %v615, %v611
    %v760 = vpack.c.b16 %v616, %v612
    %v761 = vpack.c.b16 %v621, %v617
    %v762 = vpack.c.b16 %v622, %v618
    %v763 = vpack.c.b16 %v623, %v619
    %v764 = vpack.c.b16 %v624, %v620
    %v765 = vpack.c.b16 %v629, %v625
    %v766 = vpack.c.b16 %v630, %v626
    %v767 = vpack.c.b16 %v631, %v627
    %v768 = vpack.c.b16 %v632, %v628
    %v769 = vpack.c.b16 %v637, %v633
    %v770 = vpack.c.b16 %v638, %v634
    %v771 = vpack.c.b16 %v639, %v635
    %v772 = vpack.c.b16 %v640, %v636
    %v773 = vpack.c.b16 %v645, %v641
    %v774 = vpack.c.b16 %v646, %v642
    %v775 = vpack.c.b16 %v647, %v643
    %v776 = vpack.c.b16 %v648, %v644
    %v777 = vpack.c.b16 %v653, %v649
    %v778 = vpack.c.b16 %v654, %v650
    %v779 = vpack.c.b16 %v655, %v651
    %v780 = vpack.c.b16 %v656, %v652
    %v781 = vpack.c.b16 %v661, %v657
    %v782 = vpack.c.b16 %v662, %v658
    %v783 = vpack.c.b16 %v663, %v659
    %v784 = vpack.c.b16 %v664, %v660
    %v785 = vpack.c.b16 %v669, %v665
    %v786 = vpack.c.b16 %v670, %v666
    %v787 = vpack.c.b16 %v671, %v667
    %v788 = vpack.c.b16 %v672, %v668
    %v789 = vpack.c.b16 %v677, %v673
    %v790 = vpack.c.b16 %v678, %v674
    %v791 = vpack.c.b16 %v679, %v675
    %v792 = vpack.c.b16 %v680, %v676
    %v793 = vpack.c.b16 %v685, %v681
    %v794 = vpack.c.b16 %v686, %v682
    %v795 = vpack.c.b16 %v687, %v683
    %v796 = vpack.c.b16 %v688, %v684
    %v797 = vpack.c.b16 %v693, %v689
    %v798 = vpack.c.b16 %v694, %v690
    %v799 = vpack.c.b16 %v695, %v691
    %v800 = vpack.c.b16 %v696, %v692
    %v801 = vpack.c.b16 %v701, %v697
    %v802 = vpack.c.b16 %v702, %v698
    %v803 = vpack.c.b16 %v703, %v699
    %v804 = vpack.c.b16 %v704, %v700
    %v805 = vpack.c.b16 %v709, %v705
    %v806 = vpack.c.b16 %v710, %v706
    %v807 = vpack.c.b16 %v711, %v707
    %v808 = vpack.c.b16 %v712, %v708
    %905 = vmatprep.subr.bf16.mxu0 %v714
    %906 = vmatpush1.bf16.msra.mxu0 %v713
    %907 = vmatprep.subr.bf16.mxu0 %v718
    %908 = vmatpush1.bf16.msra.mxu0 %v717
    %909 = vmatprep.subr.bf16.mxu0 %v722
    %910 = vmatpush1.bf16.msra.mxu0 %v721
    %911 = vmatprep.subr.bf16.mxu0 %v726
    %912 = vmatpush1.bf16.msra.mxu0 %v725
    %913 = vmatprep.subr.bf16.mxu0 %v730
    %914 = vmatpush1.bf16.msra.mxu0 %v729
    %915 = vmatprep.subr.bf16.mxu0 %v734
    %916 = vmatpush1.bf16.msra.mxu0 %v733
    %917 = vmatprep.subr.bf16.mxu0 %v738
    %918 = vmatpush1.bf16.msra.mxu0 %v737
    %919 = vmatprep.subr.bf16.mxu0 %v742
    %920 = vmatpush1.bf16.msra.mxu0 %v741
    %921 = vmatprep.subr.bf16.mxu0 %v746
    %922 = vmatpush1.bf16.msra.mxu0 %v745
    %923 = vmatprep.subr.bf16.mxu0 %v750
    %924 = vmatpush1.bf16.msra.mxu0 %v749
    %925 = vmatprep.subr.bf16.mxu0 %v754
    %926 = vmatpush1.bf16.msra.mxu0 %v753
    %927 = vmatprep.subr.bf16.mxu0 %v758
    %928 = vmatpush1.bf16.msra.mxu0 %v757
    %929 = vmatprep.subr.bf16.mxu0 %v762
    %930 = vmatpush1.bf16.msra.mxu0 %v761
    %931 = vmatprep.subr.bf16.mxu0 %v766
    %932 = vmatpush1.bf16.msra.mxu0 %v765
    %933 = vmatprep.subr.bf16.mxu0 %v770
    %934 = vmatpush1.bf16.msra.mxu0 %v769
    %935 = vmatprep.subr.bf16.mxu0 %v774
    %936 = vmatpush1.bf16.msra.mxu0 %v773
    %937 = vmatprep.mubr.bf16.mxu0 %v327
    %938 = vmatmul.mubr.bf16.gmra.mrb[0].mxu0 %v326
    %v939 = vpop.f32.mrb[0].mxu0
    %v940 = vadd.f32 0.0, %v939
    %v941 = vpop.f32.mrb[0].mxu0
    %v942 = vadd.f32 0.0, %v941
    %v943 = vpop.f32.mrb[0].mxu0
    %v944 = vadd.f32 0.0, %v943
    %v945 = vpop.f32.mrb[0].mxu0
    %v946 = vadd.f32 0.0, %v945
    %947 = vdwg.mxu0
    %948 = vmatprep.subr.bf16.mxu0 %v778
    %949 = vmatpush1.bf16.msra.mxu0 %v777
    %950 = vmatprep.subr.bf16.mxu0 %v782
    %951 = vmatpush1.bf16.msra.mxu0 %v781
    %952 = vmatprep.subr.bf16.mxu0 %v786
    %953 = vmatpush1.bf16.msra.mxu0 %v785
    %954 = vmatprep.subr.bf16.mxu0 %v790
    %955 = vmatpush1.bf16.msra.mxu0 %v789
    %956 = vmatprep.subr.bf16.mxu0 %v794
    %957 = vmatpush1.bf16.msra.mxu0 %v793
    %958 = vmatprep.subr.bf16.mxu0 %v798
    %959 = vmatpush1.bf16.msra.mxu0 %v797
    %960 = vmatprep.subr.bf16.mxu0 %v802
    %961 = vmatpush1.bf16.msra.mxu0 %v801
    %962 = vmatprep.subr.bf16.mxu0 %v806
    %963 = vmatpush1.bf16.msra.mxu0 %v805
    %964 = vmatprep.subr.bf16.mxu0 0
    %965 = vmatpush1.bf16.msra.mxu0 0
    %966 = vmatprep.subr.bf16.mxu0 0
    %967 = vmatpush1.bf16.msra.mxu0 0
    %968 = vmatprep.subr.bf16.mxu0 0
    %969 = vmatpush1.bf16.msra.mxu0 0
    %970 = vmatprep.subr.bf16.mxu0 0
    %971 = vmatpush1.bf16.msra.mxu0 0
    %972 = vmatprep.subr.bf16.mxu0 0
    %973 = vmatpush1.bf16.msra.mxu0 0
    %974 = vmatprep.subr.bf16.mxu0 0
    %975 = vmatpush1.bf16.msra.mxu0 0
    %976 = vmatprep.subr.bf16.mxu0 0
    %977 = vmatpush1.bf16.msra.mxu0 0
    %978 = vmatprep.subr.bf16.mxu0 0
    %979 = vmatpush1.bf16.msra.mxu0 0
    %980 = vmatprep.mubr.bf16.mxu0 0
    %981 = vmatmul.mubr.bf16.gmra.mrb[0].mxu0 %v328
    %v982 = vpop.f32.mrb[0].mxu0
    %v983 = vadd.f32 %v940, %v982
    %v984 = vpop.f32.mrb[0].mxu0
    %v985 = vadd.f32 %v942, %v984
    %v986 = vpop.f32.mrb[0].mxu0
    %v987 = vadd.f32 %v944, %v986
    %v988 = vpop.f32.mrb[0].mxu0
    %v989 = vadd.f32 %v946, %v988
    %990 = vdwg.mxu0
    %991 = vmatprep.subr.bf16.mxu0 %v716
    %992 = vmatpush1.bf16.msra.mxu0 %v715
    %993 = vmatprep.subr.bf16.mxu0 %v720
    %994 = vmatpush1.bf16.msra.mxu0 %v719
    %995 = vmatprep.subr.bf16.mxu0 %v724
    %996 = vmatpush1.bf16.msra.mxu0 %v723
    %997 = vmatprep.subr.bf16.mxu0 %v728
    %998 = vmatpush1.bf16.msra.mxu0 %v727
    %999 = vmatprep.subr.bf16.mxu0 %v732
    %1000 = vmatpush1.bf16.msra.mxu0 %v731
    %1001 = vmatprep.subr.bf16.mxu0 %v736
    %1002 = vmatpush1.bf16.msra.mxu0 %v735
    %1003 = vmatprep.subr.bf16.mxu0 %v740
    %1004 = vmatpush1.bf16.msra.mxu0 %v739
    %1005 = vmatprep.subr.bf16.mxu0 %v744
    %1006 = vmatpush1.bf16.msra.mxu0 %v743
    %1007 = vmatprep.subr.bf16.mxu0 %v748
    %1008 = vmatpush1.bf16.msra.mxu0 %v747
    %1009 = vmatprep.subr.bf16.mxu0 %v752
    %1010 = vmatpush1.bf16.msra.mxu0 %v751
    %1011 = vmatprep.subr.bf16.mxu0 %v756
    %1012 = vmatpush1.bf16.msra.mxu0 %v755
    %1013 = vmatprep.subr.bf16.mxu0 %v760
    %1014 = vmatpush1.bf16.msra.mxu0 %v759
    %1015 = vmatprep.subr.bf16.mxu0 %v764
    %1016 = vmatpush1.bf16.msra.mxu0 %v763
    %1017 = vmatprep.subr.bf16.mxu0 %v768
    %1018 = vmatpush1.bf16.msra.mxu0 %v767
    %1019 = vmatprep.subr.bf16.mxu0 %v772
    %1020 = vmatpush1.bf16.msra.mxu0 %v771
    %1021 = vmatprep.subr.bf16.mxu0 %v776
    %1022 = vmatpush1.bf16.msra.mxu0 %v775
    %1023 = vmatprep.mubr.bf16.mxu0 %v327
    %1024 = vmatmul.mubr.bf16.gmra.mrb[0].mxu0 %v326
    %v1025 = vpop.f32.mrb[0].mxu0
    %v1026 = vadd.f32 0.0, %v1025
    %v1027 = vpop.f32.mrb[0].mxu0
    %v1028 = vadd.f32 0.0, %v1027
    %v1029 = vpop.f32.mrb[0].mxu0
    %v1030 = vadd.f32 0.0, %v1029
    %v1031 = vpop.f32.mrb[0].mxu0
    %v1032 = vadd.f32 0.0, %v1031
    %1033 = vdwg.mxu0
    %1034 = vmatprep.subr.bf16.mxu0 %v780
    %1035 = vmatpush1.bf16.msra.mxu0 %v779
    %1036 = vmatprep.subr.bf16.mxu0 %v784
    %1037 = vmatpush1.bf16.msra.mxu0 %v783
    %1038 = vmatprep.subr.bf16.mxu0 %v788
    %1039 = vmatpush1.bf16.msra.mxu0 %v787
    %1040 = vmatprep.subr.bf16.mxu0 %v792
    %1041 = vmatpush1.bf16.msra.mxu0 %v791
    %1042 = vmatprep.subr.bf16.mxu0 %v796
    %1043 = vmatpush1.bf16.msra.mxu0 %v795
    %1044 = vmatprep.subr.bf16.mxu0 %v800
    %1045 = vmatpush1.bf16.msra.mxu0 %v799
    %1046 = vmatprep.subr.bf16.mxu0 %v804
    %1047 = vmatpush1.bf16.msra.mxu0 %v803
    %1048 = vmatprep.subr.bf16.mxu0 %v808
    %1049 = vmatpush1.bf16.msra.mxu0 %v807
    %1050 = vmatprep.subr.bf16.mxu0 0
    %1051 = vmatpush1.bf16.msra.mxu0 0
    %1052 = vmatprep.subr.bf16.mxu0 0
    %1053 = vmatpush1.bf16.msra.mxu0 0
    %1054 = vmatprep.subr.bf16.mxu0 0
    %1055 = vmatpush1.bf16.msra.mxu0 0
    %1056 = vmatprep.subr.bf16.mxu0 0
    %1057 = vmatpush1.bf16.msra.mxu0 0
    %1058 = vmatprep.subr.bf16.mxu0 0
    %1059 = vmatpush1.bf16.msra.mxu0 0
    %1060 = vmatprep.subr.bf16.mxu0 0
    %1061 = vmatpush1.bf16.msra.mxu0 0
    %1062 = vmatprep.subr.bf16.mxu0 0
    %1063 = vmatpush1.bf16.msra.mxu0 0
    %1064 = vmatprep.subr.bf16.mxu0 0
    %1065 = vmatpush1.bf16.msra.mxu0 0
    %1066 = vmatprep.mubr.bf16.mxu0 0
    %1067 = vmatmul.mubr.bf16.gmra.mrb[0].mxu0 %v328
    %v1068 = vpop.f32.mrb[0].mxu0
    %v1069 = vadd.f32 %v1026, %v1068
    %v1070 = vpop.f32.mrb[0].mxu0
    %v1071 = vadd.f32 %v1028, %v1070
    %v1072 = vpop.f32.mrb[0].mxu0
    %v1073 = vadd.f32 %v1030, %v1072
    %v1074 = vpop.f32.mrb[0].mxu0
    %v1075 = vadd.f32 %v1032, %v1074
    %1076 = vdwg.mxu0
    %v1077 = vpack.c.bf16 %v987, %v983
    %v1078 = vpack.c.bf16 %v989, %v985
    %v1079 = vpack.c.bf16 %v1073, %v1069
    %v1080 = vpack.c.bf16 %v1075, %v1071
    %v1081 = vld [vmem:[#allocation7] sm:$0xf]
    %v1083 = vlaneseq
    %v1084 = vshrl.u32 %v1083, 7
    %v1085 = vsub.s32 0, %v1084
    %v1086 = vrot.slane %v1081, %v1085
    %v1087 = vlaneseq
    %v1088 = vshrl.u32 %v1087, 7
    %v1089 = vsub.s32 1, %v1088
    %v1090 = vrot.slane %v1081, %v1089
    %v1091 = vlaneseq
    %v1092 = vshrl.u32 %v1091, 7
    %v1093 = vsub.s32 2, %v1092
    %v1094 = vrot.slane %v1081, %v1093
    %v1095 = vlaneseq
    %v1096 = vshrl.u32 %v1095, 7
    %v1097 = vsub.s32 3, %v1096
    %v1098 = vrot.slane %v1081, %v1097
    %v1103 = vpack.c.bf16 %v1086, %v1086
    %v1104 = vpack.c.bf16 %v1090, %v1090
    %v1105 = vpack.c.bf16 %v1094, %v1094
    %v1106 = vpack.c.bf16 %v1098, %v1098
    %v1108 = vpack.i.b16 %v1103, %v1103
    %v1110 = vlaneseq
    %v1111 = vshrl.u32 %v1110, 7
    %v1112 = vsub.s32 0, %v1111
    %v1113 = vrot.slane %v1108, %v1112
    %v1115 = vpack.i.b16 %v1104, %v1104
    %v1117 = vlaneseq
    %v1118 = vshrl.u32 %v1117, 7
    %v1119 = vsub.s32 0, %v1118
    %v1120 = vrot.slane %v1115, %v1119
    %v1122 = vpack.i.b16 %v1105, %v1105
    %v1124 = vlaneseq
    %v1125 = vshrl.u32 %v1124, 7
    %v1126 = vsub.s32 0, %v1125
    %v1127 = vrot.slane %v1122, %v1126
    %v1129 = vpack.i.b16 %v1106, %v1106
    %v1131 = vlaneseq
    %v1132 = vshrl.u32 %v1131, 7
    %v1133 = vsub.s32 0, %v1132
    %v1134 = vrot.slane %v1129, %v1133
    %v1135 = vadd.bf16 %v1077, %v1113
    %v1136 = vadd.bf16 %v1078, %v1120
    %v1137 = vadd.bf16 %v1079, %v1127
    %v1138 = vadd.bf16 %v1080, %v1134
    %v1139 = vmax.bf16 %v1135, 0
    %v1140 = vmax.bf16 %v1136, 0
    %v1141 = vmax.bf16 %v1137, 0
    %v1142 = vmax.bf16 %v1138, 0
    %v1143 = vld [vmem:[#allocation9] sm:$0xff]
    %v1144 = vld [vmem:[#allocation9 + $0x8] sm:$0xf]
    %v1145 = vld [vmem:[#allocation9 + $0xc] sm:$0xff]
    %v1146 = vld [vmem:[#allocation9 + $0x14] sm:$0xf]
    %v1147 = vld [vmem:[#allocation9 + $0x18] sm:$0xff]
    %v1148 = vld [vmem:[#allocation9 + $0x20] sm:$0xf]
    %v1149 = vld [vmem:[#allocation9 + $0x24] sm:$0xff]
    %v1150 = vld [vmem:[#allocation9 + $0x2c] sm:$0xf]
    %v1151 = vld [vmem:[#allocation9 + $0x30] sm:$0xff]
    %v1152 = vld [vmem:[#allocation9 + $0x38] sm:$0xf]
    %v1153 = vld [vmem:[#allocation9 + $0x3c] sm:$0xff]
    %v1154 = vld [vmem:[#allocation9 + $0x44] sm:$0xf]
    %v1155 = vld [vmem:[#allocation9 + $0x48] sm:$0xff]
    %v1156 = vld [vmem:[#allocation9 + $0x50] sm:$0xf]
    %v1157 = vld [vmem:[#allocation9 + $0x54] sm:$0xff]
    %v1158 = vld [vmem:[#allocation9 + $0x5c] sm:$0xf]
    %v1159 = vld [vmem:[#allocation9 + $0x60] sm:$0xff]
    %v1160 = vld [vmem:[#allocation9 + $0x68] sm:$0xf]
    %v1161 = vld [vmem:[#allocation9 + $0x6c] sm:$0xff]
    %v1162 = vld [vmem:[#allocation9 + $0x74] sm:$0xf]
    %v1163 = vld [vmem:[#allocation9 + $0x78] sm:$0xff]
    %v1164 = vld [vmem:[#allocation9 + $0x80] sm:$0xf]
    %v1165 = vld [vmem:[#allocation9 + $0x84] sm:$0xff]
    %v1166 = vld [vmem:[#allocation9 + $0x8c] sm:$0xf]
    %v1167 = vld [vmem:[#allocation9 + $0x90] sm:$0xff]
    %v1168 = vld [vmem:[#allocation9 + $0x98] sm:$0xf]
    %v1169 = vld [vmem:[#allocation9 + $0x9c] sm:$0xff]
    %v1170 = vld [vmem:[#allocation9 + $0xa4] sm:$0xf]
    %v1171 = vld [vmem:[#allocation9 + $0xa8] sm:$0xff]
    %v1172 = vld [vmem:[#allocation9 + $0xb0] sm:$0xf]
    %v1173 = vld [vmem:[#allocation9 + $0xb4] sm:$0xff]
    %v1174 = vld [vmem:[#allocation9 + $0xbc] sm:$0xf]
    %v1175 = vld [vmem:[#allocation9 + $0xc0] sm:$0xff]
    %v1176 = vld [vmem:[#allocation9 + $0xc8] sm:$0xf]
    %v1177 = vld [vmem:[#allocation9 + $0xcc] sm:$0xff]
    %v1178 = vld [vmem:[#allocation9 + $0xd4] sm:$0xf]
    %v1179 = vld [vmem:[#allocation9 + $0xd8] sm:$0xff]
    %v1180 = vld [vmem:[#allocation9 + $0xe0] sm:$0xf]
    %v1181 = vld [vmem:[#allocation9 + $0xe4] sm:$0xff]
    %v1182 = vld [vmem:[#allocation9 + $0xec] sm:$0xf]
    %v1183 = vld [vmem:[#allocation9 + $0xf0] sm:$0xff]
    %v1184 = vld [vmem:[#allocation9 + $0xf8] sm:$0xf]
    %v1185 = vld [vmem:[#allocation9 + $0xfc] sm:$0xff]
    %v1186 = vld [vmem:[#allocation9 + $0x104] sm:$0xf]
    %v1187 = vld [vmem:[#allocation9 + $0x108] sm:$0xff]
    %v1188 = vld [vmem:[#allocation9 + $0x110] sm:$0xf]
    %v1189 = vld [vmem:[#allocation9 + $0x114] sm:$0xff]
    %v1190 = vld [vmem:[#allocation9 + $0x11c] sm:$0xf]
    %v1191 = vld [vmem:[#allocation9 + $0x120] sm:$0xff]
    %v1192 = vld [vmem:[#allocation9 + $0x128] sm:$0xf]
    %v1193 = vld [vmem:[#allocation9 + $0x12c] sm:$0xff]
    %v1194 = vld [vmem:[#allocation9 + $0x134] sm:$0xf]
    %v1195 = vld [vmem:[#allocation9 + $0x138] sm:$0xff]
    %v1196 = vld [vmem:[#allocation9 + $0x140] sm:$0xf]
    %v1197 = vld [vmem:[#allocation9 + $0x144] sm:$0xff]
    %v1198 = vld [vmem:[#allocation9 + $0x14c] sm:$0xf]
    %v1199 = vld [vmem:[#allocation9 + $0x150] sm:$0xff]
    %v1200 = vld [vmem:[#allocation9 + $0x158] sm:$0xf]
    %v1201 = vld [vmem:[#allocation9 + $0x15c] sm:$0xff]
    %v1202 = vld [vmem:[#allocation9 + $0x164] sm:$0xf]
    %v1203 = vld [vmem:[#allocation9 + $0x168] sm:$0xff]
    %v1204 = vld [vmem:[#allocation9 + $0x170] sm:$0xf]
    %v1205 = vld [vmem:[#allocation9 + $0x174] sm:$0xff]
    %v1206 = vld [vmem:[#allocation9 + $0x17c] sm:$0xf]
    %v1207 = vld [vmem:[#allocation9 + $0x180] sm:$0xff]
    %v1208 = vld [vmem:[#allocation9 + $0x188] sm:$0xf]
    %v1209 = vld [vmem:[#allocation9 + $0x18c] sm:$0xff]
    %v1210 = vld [vmem:[#allocation9 + $0x194] sm:$0xf]
    %v1211 = vld [vmem:[#allocation9 + $0x198] sm:$0xff]
    %v1212 = vld [vmem:[#allocation9 + $0x1a0] sm:$0xf]
    %v1213 = vld [vmem:[#allocation9 + $0x1a4] sm:$0xff]
    %v1214 = vld [vmem:[#allocation9 + $0x1ac] sm:$0xf]
    %v1215 = vld [vmem:[#allocation9 + $0x1b0] sm:$0xff]
    %v1216 = vld [vmem:[#allocation9 + $0x1b8] sm:$0xf]
    %v1217 = vld [vmem:[#allocation9 + $0x1bc] sm:$0xff]
    %v1218 = vld [vmem:[#allocation9 + $0x1c4] sm:$0xf]
    %v1219 = vld [vmem:[#allocation9 + $0x1c8] sm:$0xff]
    %v1220 = vld [vmem:[#allocation9 + $0x1d0] sm:$0xf]
    %v1221 = vld [vmem:[#allocation9 + $0x1d4] sm:$0xff]
    %v1222 = vld [vmem:[#allocation9 + $0x1dc] sm:$0xf]
    %v1223 = vld [vmem:[#allocation9 + $0x1e0] sm:$0xff]
    %v1224 = vld [vmem:[#allocation9 + $0x1e8] sm:$0xf]
    %v1225 = vld [vmem:[#allocation9 + $0x1ec] sm:$0xff]
    %v1226 = vld [vmem:[#allocation9 + $0x1f4] sm:$0xf]
    %v1227 = vld [vmem:[#allocation9 + $0x1f8] sm:$0xff]
    %v1228 = vld [vmem:[#allocation9 + $0x200] sm:$0xf]
    %v1229 = vld [vmem:[#allocation9 + $0x204] sm:$0xff]
    %v1230 = vld [vmem:[#allocation9 + $0x20c] sm:$0xf]
    %v1231 = vld [vmem:[#allocation9 + $0x210] sm:$0xff]
    %v1232 = vld [vmem:[#allocation9 + $0x218] sm:$0xf]
    %v1233 = vld [vmem:[#allocation9 + $0x21c] sm:$0xff]
    %v1234 = vld [vmem:[#allocation9 + $0x224] sm:$0xf]
    %v1235 = vld [vmem:[#allocation9 + $0x228] sm:$0xff]
    %v1236 = vld [vmem:[#allocation9 + $0x230] sm:$0xf]
    %v1237 = vld [vmem:[#allocation9 + $0x234] sm:$0xff]
    %v1238 = vld [vmem:[#allocation9 + $0x23c] sm:$0xf]
    %v1239 = vld [vmem:[#allocation9 + $0x240] sm:$0xff]
    %v1240 = vld [vmem:[#allocation9 + $0x248] sm:$0xf]
    %v1241 = vld [vmem:[#allocation9 + $0x24c] sm:$0xff]
    %v1242 = vld [vmem:[#allocation9 + $0x254] sm:$0xf]
    %v1243 = vld [vmem:[#allocation9 + $0x258] sm:$0xff]
    %v1244 = vld [vmem:[#allocation9 + $0x260] sm:$0xf]
    %v1245 = vld [vmem:[#allocation9 + $0x264] sm:$0xff]
    %v1246 = vld [vmem:[#allocation9 + $0x26c] sm:$0xf]
    %v1247 = vld [vmem:[#allocation9 + $0x270] sm:$0xff]
    %v1248 = vld [vmem:[#allocation9 + $0x278] sm:$0xf]
    %v1249 = vld [vmem:[#allocation9 + $0x27c] sm:$0xff]
    %v1250 = vld [vmem:[#allocation9 + $0x284] sm:$0xf]
    %v1251 = vld [vmem:[#allocation9 + $0x288] sm:$0xff]
    %v1252 = vld [vmem:[#allocation9 + $0x290] sm:$0xf]
    %v1253 = vld [vmem:[#allocation9 + $0x294] sm:$0xff]
    %v1254 = vld [vmem:[#allocation9 + $0x29c] sm:$0xf]
    %v1255 = vld [vmem:[#allocation9 + $0x2a0] sm:$0xff]
    %v1256 = vld [vmem:[#allocation9 + $0x2a8] sm:$0xf]
    %v1257 = vld [vmem:[#allocation9 + $0x2ac] sm:$0xff]
    %v1258 = vld [vmem:[#allocation9 + $0x2b4] sm:$0xf]
    %v1259 = vld [vmem:[#allocation9 + $0x2b8] sm:$0xff]
    %v1260 = vld [vmem:[#allocation9 + $0x2c0] sm:$0xf]
    %v1261 = vld [vmem:[#allocation9 + $0x2c4] sm:$0xff]
    %v1262 = vld [vmem:[#allocation9 + $0x2cc] sm:$0xf]
    %v1263 = vld [vmem:[#allocation9 + $0x2d0] sm:$0xff]
    %v1264 = vld [vmem:[#allocation9 + $0x2d8] sm:$0xf]
    %v1265 = vld [vmem:[#allocation9 + $0x2dc] sm:$0xff]
    %v1266 = vld [vmem:[#allocation9 + $0x2e4] sm:$0xf]
    %v1267 = vld [vmem:[#allocation9 + $0x2e8] sm:$0xff]
    %v1268 = vld [vmem:[#allocation9 + $0x2f0] sm:$0xf]
    %v1269 = vld [vmem:[#allocation9 + $0x2f4] sm:$0xff]
    %v1270 = vld [vmem:[#allocation9 + $0x2fc] sm:$0xf]
    %v1399 = vunpack.c.l.b16 %v1143
    %v1400 = vunpack.c.h.b16 %v1143
    %v1401 = vunpack.c.l.b16 %v1144
    %v1402 = vunpack.c.l.b16 %v1145
    %v1403 = vunpack.c.h.b16 %v1145
    %v1404 = vunpack.c.l.b16 %v1146
    %v1405 = vunpack.c.l.b16 %v1147
    %v1406 = vunpack.c.h.b16 %v1147
    %v1407 = vunpack.c.l.b16 %v1148
    %v1408 = vunpack.c.l.b16 %v1149
    %v1409 = vunpack.c.h.b16 %v1149
    %v1410 = vunpack.c.l.b16 %v1150
    %v1411 = vunpack.c.l.b16 %v1151
    %v1412 = vunpack.c.h.b16 %v1151
    %v1413 = vunpack.c.l.b16 %v1152
    %v1414 = vunpack.c.l.b16 %v1153
    %v1415 = vunpack.c.h.b16 %v1153
    %v1416 = vunpack.c.l.b16 %v1154
    %v1417 = vunpack.c.l.b16 %v1155
    %v1418 = vunpack.c.h.b16 %v1155
    %v1419 = vunpack.c.l.b16 %v1156
    %v1420 = vunpack.c.l.b16 %v1157
    %v1421 = vunpack.c.h.b16 %v1157
    %v1422 = vunpack.c.l.b16 %v1158
    %v1423 = vunpack.c.l.b16 %v1159
    %v1424 = vunpack.c.h.b16 %v1159
    %v1425 = vunpack.c.l.b16 %v1160
    %v1426 = vunpack.c.l.b16 %v1161
    %v1427 = vunpack.c.h.b16 %v1161
    %v1428 = vunpack.c.l.b16 %v1162
    %v1429 = vunpack.c.l.b16 %v1163
    %v1430 = vunpack.c.h.b16 %v1163
    %v1431 = vunpack.c.l.b16 %v1164
    %v1432 = vunpack.c.l.b16 %v1165
    %v1433 = vunpack.c.h.b16 %v1165
    %v1434 = vunpack.c.l.b16 %v1166
    %v1435 = vunpack.c.l.b16 %v1167
    %v1436 = vunpack.c.h.b16 %v1167
    %v1437 = vunpack.c.l.b16 %v1168
    %v1438 = vunpack.c.l.b16 %v1169
    %v1439 = vunpack.c.h.b16 %v1169
    %v1440 = vunpack.c.l.b16 %v1170
    %v1441 = vunpack.c.l.b16 %v1171
    %v1442 = vunpack.c.h.b16 %v1171
    %v1443 = vunpack.c.l.b16 %v1172
    %v1444 = vunpack.c.l.b16 %v1173
    %v1445 = vunpack.c.h.b16 %v1173
    %v1446 = vunpack.c.l.b16 %v1174
    %v1447 = vunpack.c.l.b16 %v1175
    %v1448 = vunpack.c.h.b16 %v1175
    %v1449 = vunpack.c.l.b16 %v1176
    %v1450 = vunpack.c.l.b16 %v1177
    %v1451 = vunpack.c.h.b16 %v1177
    %v1452 = vunpack.c.l.b16 %v1178
    %v1453 = vunpack.c.l.b16 %v1179
    %v1454 = vunpack.c.h.b16 %v1179
    %v1455 = vunpack.c.l.b16 %v1180
    %v1456 = vunpack.c.l.b16 %v1181
    %v1457 = vunpack.c.h.b16 %v1181
    %v1458 = vunpack.c.l.b16 %v1182
    %v1459 = vunpack.c.l.b16 %v1183
    %v1460 = vunpack.c.h.b16 %v1183
    %v1461 = vunpack.c.l.b16 %v1184
    %v1462 = vunpack.c.l.b16 %v1185
    %v1463 = vunpack.c.h.b16 %v1185
    %v1464 = vunpack.c.l.b16 %v1186
    %v1465 = vunpack.c.l.b16 %v1187
    %v1466 = vunpack.c.h.b16 %v1187
    %v1467 = vunpack.c.l.b16 %v1188
    %v1468 = vunpack.c.l.b16 %v1189
    %v1469 = vunpack.c.h.b16 %v1189
    %v1470 = vunpack.c.l.b16 %v1190
    %v1471 = vunpack.c.l.b16 %v1191
    %v1472 = vunpack.c.h.b16 %v1191
    %v1473 = vunpack.c.l.b16 %v1192
    %v1474 = vunpack.c.l.b16 %v1193
    %v1475 = vunpack.c.h.b16 %v1193
    %v1476 = vunpack.c.l.b16 %v1194
    %v1477 = vunpack.c.l.b16 %v1195
    %v1478 = vunpack.c.h.b16 %v1195
    %v1479 = vunpack.c.l.b16 %v1196
    %v1480 = vunpack.c.l.b16 %v1197
    %v1481 = vunpack.c.h.b16 %v1197
    %v1482 = vunpack.c.l.b16 %v1198
    %v1483 = vunpack.c.l.b16 %v1199
    %v1484 = vunpack.c.h.b16 %v1199
    %v1485 = vunpack.c.l.b16 %v1200
    %v1486 = vunpack.c.l.b16 %v1201
    %v1487 = vunpack.c.h.b16 %v1201
    %v1488 = vunpack.c.l.b16 %v1202
    %v1489 = vunpack.c.l.b16 %v1203
    %v1490 = vunpack.c.h.b16 %v1203
    %v1491 = vunpack.c.l.b16 %v1204
    %v1492 = vunpack.c.l.b16 %v1205
    %v1493 = vunpack.c.h.b16 %v1205
    %v1494 = vunpack.c.l.b16 %v1206
    %v1495 = vunpack.c.l.b16 %v1207
    %v1496 = vunpack.c.h.b16 %v1207
    %v1497 = vunpack.c.l.b16 %v1208
    %v1498 = vunpack.c.l.b16 %v1209
    %v1499 = vunpack.c.h.b16 %v1209
    %v1500 = vunpack.c.l.b16 %v1210
    %v1501 = vunpack.c.l.b16 %v1211
    %v1502 = vunpack.c.h.b16 %v1211
    %v1503 = vunpack.c.l.b16 %v1212
    %v1504 = vunpack.c.l.b16 %v1213
    %v1505 = vunpack.c.h.b16 %v1213
    %v1506 = vunpack.c.l.b16 %v1214
    %v1507 = vunpack.c.l.b16 %v1215
    %v1508 = vunpack.c.h.b16 %v1215
    %v1509 = vunpack.c.l.b16 %v1216
    %v1510 = vunpack.c.l.b16 %v1217
    %v1511 = vunpack.c.h.b16 %v1217
    %v1512 = vunpack.c.l.b16 %v1218
    %v1513 = vunpack.c.l.b16 %v1219
    %v1514 = vunpack.c.h.b16 %v1219
    %v1515 = vunpack.c.l.b16 %v1220
    %v1516 = vunpack.c.l.b16 %v1221
    %v1517 = vunpack.c.h.b16 %v1221
    %v1518 = vunpack.c.l.b16 %v1222
    %v1519 = vunpack.c.l.b16 %v1223
    %v1520 = vunpack.c.h.b16 %v1223
    %v1521 = vunpack.c.l.b16 %v1224
    %v1522 = vunpack.c.l.b16 %v1225
    %v1523 = vunpack.c.h.b16 %v1225
    %v1524 = vunpack.c.l.b16 %v1226
    %v1525 = vunpack.c.l.b16 %v1227
    %v1526 = vunpack.c.h.b16 %v1227
    %v1527 = vunpack.c.l.b16 %v1228
    %v1528 = vunpack.c.l.b16 %v1229
    %v1529 = vunpack.c.h.b16 %v1229
    %v1530 = vunpack.c.l.b16 %v1230
    %v1531 = vunpack.c.l.b16 %v1231
    %v1532 = vunpack.c.h.b16 %v1231
    %v1533 = vunpack.c.l.b16 %v1232
    %v1534 = vunpack.c.l.b16 %v1233
    %v1535 = vunpack.c.h.b16 %v1233
    %v1536 = vunpack.c.l.b16 %v1234
    %v1537 = vunpack.c.l.b16 %v1235
    %v1538 = vunpack.c.h.b16 %v1235
    %v1539 = vunpack.c.l.b16 %v1236
    %v1540 = vunpack.c.l.b16 %v1237
    %v1541 = vunpack.c.h.b16 %v1237
    %v1542 = vunpack.c.l.b16 %v1238
    %v1543 = vunpack.c.l.b16 %v1239
    %v1544 = vunpack.c.h.b16 %v1239
    %v1545 = vunpack.c.l.b16 %v1240
    %v1546 = vunpack.c.l.b16 %v1241
    %v1547 = vunpack.c.h.b16 %v1241
    %v1548 = vunpack.c.l.b16 %v1242
    %v1549 = vunpack.c.l.b16 %v1243
    %v1550 = vunpack.c.h.b16 %v1243
    %v1551 = vunpack.c.l.b16 %v1244
    %v1552 = vunpack.c.l.b16 %v1245
    %v1553 = vunpack.c.h.b16 %v1245
    %v1554 = vunpack.c.l.b16 %v1246
    %v1555 = vunpack.c.l.b16 %v1247
    %v1556 = vunpack.c.h.b16 %v1247
    %v1557 = vunpack.c.l.b16 %v1248
    %v1558 = vunpack.c.l.b16 %v1249
    %v1559 = vunpack.c.h.b16 %v1249
    %v1560 = vunpack.c.l.b16 %v1250
    %v1561 = vunpack.c.l.b16 %v1251
    %v1562 = vunpack.c.h.b16 %v1251
    %v1563 = vunpack.c.l.b16 %v1252
    %v1564 = vunpack.c.l.b16 %v1253
    %v1565 = vunpack.c.h.b16 %v1253
    %v1566 = vunpack.c.l.b16 %v1254
    %v1567 = vunpack.c.l.b16 %v1255
    %v1568 = vunpack.c.h.b16 %v1255
    %v1569 = vunpack.c.l.b16 %v1256
    %v1570 = vunpack.c.l.b16 %v1257
    %v1571 = vunpack.c.h.b16 %v1257
    %v1572 = vunpack.c.l.b16 %v1258
    %v1573 = vunpack.c.l.b16 %v1259
    %v1574 = vunpack.c.h.b16 %v1259
    %v1575 = vunpack.c.l.b16 %v1260
    %v1576 = vunpack.c.l.b16 %v1261
    %v1577 = vunpack.c.h.b16 %v1261
    %v1578 = vunpack.c.l.b16 %v1262
    %v1579 = vunpack.c.l.b16 %v1263
    %v1580 = vunpack.c.h.b16 %v1263
    %v1581 = vunpack.c.l.b16 %v1264
    %v1582 = vunpack.c.l.b16 %v1265
    %v1583 = vunpack.c.h.b16 %v1265
    %v1584 = vunpack.c.l.b16 %v1266
    %v1585 = vunpack.c.l.b16 %v1267
    %v1586 = vunpack.c.h.b16 %v1267
    %v1587 = vunpack.c.l.b16 %v1268
    %v1588 = vunpack.c.l.b16 %v1269
    %v1589 = vunpack.c.h.b16 %v1269
    %v1590 = vunpack.c.l.b16 %v1270
    %v1591 = vpack.c.b16 %v1402, %v1399
    %v1592 = vpack.c.b16 %v1403, %v1400
    %v1593 = vpack.c.b16 %v1404, %v1401
    %v1594 = vpack.c.b16 %v1408, %v1405
    %v1595 = vpack.c.b16 %v1409, %v1406
    %v1596 = vpack.c.b16 %v1410, %v1407
    %v1597 = vpack.c.b16 %v1414, %v1411
    %v1598 = vpack.c.b16 %v1415, %v1412
    %v1599 = vpack.c.b16 %v1416, %v1413
    %v1600 = vpack.c.b16 %v1420, %v1417
    %v1601 = vpack.c.b16 %v1421, %v1418
    %v1602 = vpack.c.b16 %v1422, %v1419
    %v1603 = vpack.c.b16 %v1426, %v1423
    %v1604 = vpack.c.b16 %v1427, %v1424
    %v1605 = vpack.c.b16 %v1428, %v1425
    %v1606 = vpack.c.b16 %v1432, %v1429
    %v1607 = vpack.c.b16 %v1433, %v1430
    %v1608 = vpack.c.b16 %v1434, %v1431
    %v1609 = vpack.c.b16 %v1438, %v1435
    %v1610 = vpack.c.b16 %v1439, %v1436
    %v1611 = vpack.c.b16 %v1440, %v1437
    %v1612 = vpack.c.b16 %v1444, %v1441
    %v1613 = vpack.c.b16 %v1445, %v1442
    %v1614 = vpack.c.b16 %v1446, %v1443
    %v1615 = vpack.c.b16 %v1450, %v1447
    %v1616 = vpack.c.b16 %v1451, %v1448
    %v1617 = vpack.c.b16 %v1452, %v1449
    %v1618 = vpack.c.b16 %v1456, %v1453
    %v1619 = vpack.c.b16 %v1457, %v1454
    %v1620 = vpack.c.b16 %v1458, %v1455
    %v1621 = vpack.c.b16 %v1462, %v1459
    %v1622 = vpack.c.b16 %v1463, %v1460
    %v1623 = vpack.c.b16 %v1464, %v1461
    %v1624 = vpack.c.b16 %v1468, %v1465
    %v1625 = vpack.c.b16 %v1469, %v1466
    %v1626 = vpack.c.b16 %v1470, %v1467
    %v1627 = vpack.c.b16 %v1474, %v1471
    %v1628 = vpack.c.b16 %v1475, %v1472
    %v1629 = vpack.c.b16 %v1476, %v1473
    %v1630 = vpack.c.b16 %v1480, %v1477
    %v1631 = vpack.c.b16 %v1481, %v1478
    %v1632 = vpack.c.b16 %v1482, %v1479
    %v1633 = vpack.c.b16 %v1486, %v1483
    %v1634 = vpack.c.b16 %v1487, %v1484
    %v1635 = vpack.c.b16 %v1488, %v1485
    %v1636 = vpack.c.b16 %v1492, %v1489
    %v1637 = vpack.c.b16 %v1493, %v1490
    %v1638 = vpack.c.b16 %v1494, %v1491
    %v1639 = vpack.c.b16 %v1498, %v1495
    %v1640 = vpack.c.b16 %v1499, %v1496
    %v1641 = vpack.c.b16 %v1500, %v1497
    %v1642 = vpack.c.b16 %v1504, %v1501
    %v1643 = vpack.c.b16 %v1505, %v1502
    %v1644 = vpack.c.b16 %v1506, %v1503
    %v1645 = vpack.c.b16 %v1510, %v1507
    %v1646 = vpack.c.b16 %v1511, %v1508
    %v1647 = vpack.c.b16 %v1512, %v1509
    %v1648 = vpack.c.b16 %v1516, %v1513
    %v1649 = vpack.c.b16 %v1517, %v1514
    %v1650 = vpack.c.b16 %v1518, %v1515
    %v1651 = vpack.c.b16 %v1522, %v1519
    %v1652 = vpack.c.b16 %v1523, %v1520
    %v1653 = vpack.c.b16 %v1524, %v1521
    %v1654 = vpack.c.b16 %v1528, %v1525
    %v1655 = vpack.c.b16 %v1529, %v1526
    %v1656 = vpack.c.b16 %v1530, %v1527
    %v1657 = vpack.c.b16 %v1534, %v1531
    %v1658 = vpack.c.b16 %v1535, %v1532
    %v1659 = vpack.c.b16 %v1536, %v1533
    %v1660 = vpack.c.b16 %v1540, %v1537
    %v1661 = vpack.c.b16 %v1541, %v1538
    %v1662 = vpack.c.b16 %v1542, %v1539
    %v1663 = vpack.c.b16 %v1546, %v1543
    %v1664 = vpack.c.b16 %v1547, %v1544
    %v1665 = vpack.c.b16 %v1548, %v1545
    %v1666 = vpack.c.b16 %v1552, %v1549
    %v1667 = vpack.c.b16 %v1553, %v1550
    %v1668 = vpack.c.b16 %v1554, %v1551
    %v1669 = vpack.c.b16 %v1558, %v1555
    %v1670 = vpack.c.b16 %v1559, %v1556
    %v1671 = vpack.c.b16 %v1560, %v1557
    %v1672 = vpack.c.b16 %v1564, %v1561
    %v1673 = vpack.c.b16 %v1565, %v1562
    %v1674 = vpack.c.b16 %v1566, %v1563
    %v1675 = vpack.c.b16 %v1570, %v1567
    %v1676 = vpack.c.b16 %v1571, %v1568
    %v1677 = vpack.c.b16 %v1572, %v1569
    %v1678 = vpack.c.b16 %v1576, %v1573
    %v1679 = vpack.c.b16 %v1577, %v1574
    %v1680 = vpack.c.b16 %v1578, %v1575
    %v1681 = vpack.c.b16 %v1582, %v1579
    %v1682 = vpack.c.b16 %v1583, %v1580
    %v1683 = vpack.c.b16 %v1584, %v1581
    %v1684 = vpack.c.b16 %v1588, %v1585
    %v1685 = vpack.c.b16 %v1589, %v1586
    %v1686 = vpack.c.b16 %v1590, %v1587
    %1783 = vmatprep.subr.bf16.mxu0 %v1592
    %1784 = vmatpush1.bf16.msra.mxu0 %v1591
    %1785 = vmatprep.subr.bf16.mxu0 %v1595
    %1786 = vmatpush1.bf16.msra.mxu0 %v1594
    %1787 = vmatprep.subr.bf16.mxu0 %v1598
    %1788 = vmatpush1.bf16.msra.mxu0 %v1597
    %1789 = vmatprep.subr.bf16.mxu0 %v1601
    %1790 = vmatpush1.bf16.msra.mxu0 %v1600
    %1791 = vmatprep.subr.bf16.mxu0 %v1604
    %1792 = vmatpush1.bf16.msra.mxu0 %v1603
    %1793 = vmatprep.subr.bf16.mxu0 %v1607
    %1794 = vmatpush1.bf16.msra.mxu0 %v1606
    %1795 = vmatprep.subr.bf16.mxu0 %v1610
    %1796 = vmatpush1.bf16.msra.mxu0 %v1609
    %1797 = vmatprep.subr.bf16.mxu0 %v1613
    %1798 = vmatpush1.bf16.msra.mxu0 %v1612
    %1799 = vmatprep.subr.bf16.mxu0 %v1616
    %1800 = vmatpush1.bf16.msra.mxu0 %v1615
    %1801 = vmatprep.subr.bf16.mxu0 %v1619
    %1802 = vmatpush1.bf16.msra.mxu0 %v1618
    %1803 = vmatprep.subr.bf16.mxu0 %v1622
    %1804 = vmatpush1.bf16.msra.mxu0 %v1621
    %1805 = vmatprep.subr.bf16.mxu0 %v1625
    %1806 = vmatpush1.bf16.msra.mxu0 %v1624
    %1807 = vmatprep.subr.bf16.mxu0 %v1628
    %1808 = vmatpush1.bf16.msra.mxu0 %v1627
    %1809 = vmatprep.subr.bf16.mxu0 %v1631
    %1810 = vmatpush1.bf16.msra.mxu0 %v1630
    %1811 = vmatprep.subr.bf16.mxu0 %v1634
    %1812 = vmatpush1.bf16.msra.mxu0 %v1633
    %1813 = vmatprep.subr.bf16.mxu0 %v1637
    %1814 = vmatpush1.bf16.msra.mxu0 %v1636
    %1815 = vmatprep.mubr.bf16.mxu0 %v1140
    %1816 = vmatmul.mubr.bf16.gmra.mrb[0].mxu0 %v1139
    %v1817 = vpop.f32.mrb[0].mxu0
    %v1818 = vadd.f32 0.0, %v1817
    %v1819 = vpop.f32.mrb[0].mxu0
    %v1820 = vadd.f32 0.0, %v1819
    %v1821 = vpop.f32.mrb[0].mxu0
    %v1822 = vadd.f32 0.0, %v1821
    %v1823 = vpop.f32.mrb[0].mxu0
    %v1824 = vadd.f32 0.0, %v1823
    %1825 = vdwg.mxu0
    %1826 = vmatprep.subr.bf16.mxu0 %v1640
    %1827 = vmatpush1.bf16.msra.mxu0 %v1639
    %1828 = vmatprep.subr.bf16.mxu0 %v1643
    %1829 = vmatpush1.bf16.msra.mxu0 %v1642
    %1830 = vmatprep.subr.bf16.mxu0 %v1646
    %1831 = vmatpush1.bf16.msra.mxu0 %v1645
    %1832 = vmatprep.subr.bf16.mxu0 %v1649
    %1833 = vmatpush1.bf16.msra.mxu0 %v1648
    %1834 = vmatprep.subr.bf16.mxu0 %v1652
    %1835 = vmatpush1.bf16.msra.mxu0 %v1651
    %1836 = vmatprep.subr.bf16.mxu0 %v1655
    %1837 = vmatpush1.bf16.msra.mxu0 %v1654
    %1838 = vmatprep.subr.bf16.mxu0 %v1658
    %1839 = vmatpush1.bf16.msra.mxu0 %v1657
    %1840 = vmatprep.subr.bf16.mxu0 %v1661
    %1841 = vmatpush1.bf16.msra.mxu0 %v1660
    %1842 = vmatprep.subr.bf16.mxu0 %v1664
    %1843 = vmatpush1.bf16.msra.mxu0 %v1663
    %1844 = vmatprep.subr.bf16.mxu0 %v1667
    %1845 = vmatpush1.bf16.msra.mxu0 %v1666
    %1846 = vmatprep.subr.bf16.mxu0 %v1670
    %1847 = vmatpush1.bf16.msra.mxu0 %v1669
    %1848 = vmatprep.subr.bf16.mxu0 %v1673
    %1849 = vmatpush1.bf16.msra.mxu0 %v1672
    %1850 = vmatprep.subr.bf16.mxu0 %v1676
    %1851 = vmatpush1.bf16.msra.mxu0 %v1675
    %1852 = vmatprep.subr.bf16.mxu0 %v1679
    %1853 = vmatpush1.bf16.msra.mxu0 %v1678
    %1854 = vmatprep.subr.bf16.mxu0 %v1682
    %1855 = vmatpush1.bf16.msra.mxu0 %v1681
    %1856 = vmatprep.subr.bf16.mxu0 %v1685
    %1857 = vmatpush1.bf16.msra.mxu0 %v1684
    %1858 = vmatprep.mubr.bf16.mxu0 %v1142
    %1859 = vmatmul.mubr.bf16.gmra.mrb[0].mxu0 %v1141
    %v1860 = vpop.f32.mrb[0].mxu0
    %v1861 = vadd.f32 %v1818, %v1860
    %v1862 = vpop.f32.mrb[0].mxu0
    %v1863 = vadd.f32 %v1820, %v1862
    %v1864 = vpop.f32.mrb[0].mxu0
    %v1865 = vadd.f32 %v1822, %v1864
    %v1866 = vpop.f32.mrb[0].mxu0
    %v1867 = vadd.f32 %v1824, %v1866
    %1868 = vdwg.mxu0
    %1869 = vmatprep.subr.bf16.mxu0 0
    %1870 = vmatpush1.bf16.msra.mxu0 %v1593
    %1871 = vmatprep.subr.bf16.mxu0 0
    %1872 = vmatpush1.bf16.msra.mxu0 %v1596
    %1873 = vmatprep.subr.bf16.mxu0 0
    %1874 = vmatpush1.bf16.msra.mxu0 %v1599
    %1875 = vmatprep.subr.bf16.mxu0 0
    %1876 = vmatpush1.bf16.msra.mxu0 %v1602
    %1877 = vmatprep.subr.bf16.mxu0 0
    %1878 = vmatpush1.bf16.msra.mxu0 %v1605
    %1879 = vmatprep.subr.bf16.mxu0 0
    %1880 = vmatpush1.bf16.msra.mxu0 %v1608
    %1881 = vmatprep.subr.bf16.mxu0 0
    %1882 = vmatpush1.bf16.msra.mxu0 %v1611
    %1883 = vmatprep.subr.bf16.mxu0 0
    %1884 = vmatpush1.bf16.msra.mxu0 %v1614
    %1885 = vmatprep.subr.bf16.mxu0 0
    %1886 = vmatpush1.bf16.msra.mxu0 %v1617
    %1887 = vmatprep.subr.bf16.mxu0 0
    %1888 = vmatpush1.bf16.msra.mxu0 %v1620
    %1889 = vmatprep.subr.bf16.mxu0 0
    %1890 = vmatpush1.bf16.msra.mxu0 %v1623
    %1891 = vmatprep.subr.bf16.mxu0 0
    %1892 = vmatpush1.bf16.msra.mxu0 %v1626
    %1893 = vmatprep.subr.bf16.mxu0 0
    %1894 = vmatpush1.bf16.msra.mxu0 %v1629
    %1895 = vmatprep.subr.bf16.mxu0 0
    %1896 = vmatpush1.bf16.msra.mxu0 %v1632
    %1897 = vmatprep.subr.bf16.mxu0 0
    %1898 = vmatpush1.bf16.msra.mxu0 %v1635
    %1899 = vmatprep.subr.bf16.mxu0 0
    %1900 = vmatpush1.bf16.msra.mxu0 %v1638
    %1901 = vmatprep.mubr.bf16.mxu0 %v1140
    %1902 = vmatmul.mubr.bf16.gmra.mrb[0].mxu0 %v1139
    %v1903 = vpop.f32.mrb[0].mxu0
    %v1904 = vadd.f32 0.0, %v1903
    %v1905 = vpop.f32.mrb[0].mxu0
    %v1906 = vpop.f32.mrb[0].mxu0
    %v1907 = vadd.f32 0.0, %v1906
    %v1908 = vpop.f32.mrb[0].mxu0
    %1909 = vdwg.mxu0
    %1910 = vmatprep.subr.bf16.mxu0 0
    %1911 = vmatpush1.bf16.msra.mxu0 %v1641
    %1912 = vmatprep.subr.bf16.mxu0 0
    %1913 = vmatpush1.bf16.msra.mxu0 %v1644
    %1914 = vmatprep.subr.bf16.mxu0 0
    %1915 = vmatpush1.bf16.msra.mxu0 %v1647
    %1916 = vmatprep.subr.bf16.mxu0 0
    %1917 = vmatpush1.bf16.msra.mxu0 %v1650
    %1918 = vmatprep.subr.bf16.mxu0 0
    %1919 = vmatpush1.bf16.msra.mxu0 %v1653
    %1920 = vmatprep.subr.bf16.mxu0 0
    %1921 = vmatpush1.bf16.msra.mxu0 %v1656
    %1922 = vmatprep.subr.bf16.mxu0 0
    %1923 = vmatpush1.bf16.msra.mxu0 %v1659
    %1924 = vmatprep.subr.bf16.mxu0 0
    %1925 = vmatpush1.bf16.msra.mxu0 %v1662
    %1926 = vmatprep.subr.bf16.mxu0 0
    %1927 = vmatpush1.bf16.msra.mxu0 %v1665
    %1928 = vmatprep.subr.bf16.mxu0 0
    %1929 = vmatpush1.bf16.msra.mxu0 %v1668
    %1930 = vmatprep.subr.bf16.mxu0 0
    %1931 = vmatpush1.bf16.msra.mxu0 %v1671
    %1932 = vmatprep.subr.bf16.mxu0 0
    %1933 = vmatpush1.bf16.msra.mxu0 %v1674
    %1934 = vmatprep.subr.bf16.mxu0 0
    %1935 = vmatpush1.bf16.msra.mxu0 %v1677
    %1936 = vmatprep.subr.bf16.mxu0 0
    %1937 = vmatpush1.bf16.msra.mxu0 %v1680
    %1938 = vmatprep.subr.bf16.mxu0 0
    %1939 = vmatpush1.bf16.msra.mxu0 %v1683
    %1940 = vmatprep.subr.bf16.mxu0 0
    %1941 = vmatpush1.bf16.msra.mxu0 %v1686
    %1942 = vmatprep.mubr.bf16.mxu0 %v1142
    %1943 = vmatmul.mubr.bf16.gmra.mrb[0].mxu0 %v1141
    %v1944 = vpop.f32.mrb[0].mxu0
    %v1945 = vadd.f32 %v1904, %v1944
    %v1946 = vpop.f32.mrb[0].mxu0
    %v1947 = vpop.f32.mrb[0].mxu0
    %v1948 = vadd.f32 %v1907, %v1947
    %v1949 = vpop.f32.mrb[0].mxu0
    %1950 = vdwg.mxu0
    %v1951 = vpack.c.bf16 %v1865, %v1861
    %v1952 = vpack.c.bf16 %v1867, %v1863
    %v1953 = vpack.c.bf16 %v1948, %v1945
    %v1954 = vld [vmem:[#allocation10] sm:$0x7]
    %v1956 = vlaneseq
    %v1957 = vshrl.u32 %v1956, 7
    %v1958 = vsub.s32 0, %v1957
    %v1959 = vrot.slane %v1954, %v1958
    %v1960 = vlaneseq
    %v1961 = vshrl.u32 %v1960, 7
    %v1962 = vsub.s32 1, %v1961
    %v1963 = vrot.slane %v1954, %v1962
    %v1964 = vlaneseq
    %v1965 = vshrl.u32 %v1964, 7
    %v1966 = vsub.s32 2, %v1965
    %v1967 = vrot.slane %v1954, %v1966
    %v1971 = vpack.c.bf16 %v1959, %v1959
    %v1972 = vpack.c.bf16 %v1963, %v1963
    %v1973 = vpack.c.bf16 %v1967, %v1967
    %v1975 = vpack.i.b16 %v1971, %v1971
    %v1977 = vlaneseq
    %v1978 = vshrl.u32 %v1977, 7
    %v1979 = vsub.s32 0, %v1978
    %v1980 = vrot.slane %v1975, %v1979
    %v1982 = vpack.i.b16 %v1972, %v1972
    %v1984 = vlaneseq
    %v1985 = vshrl.u32 %v1984, 7
    %v1986 = vsub.s32 0, %v1985
    %v1987 = vrot.slane %v1982, %v1986
    %v1989 = vpack.i.b16 %v1973, %v1973
    %v1991 = vlaneseq
    %v1992 = vshrl.u32 %v1991, 7
    %v1993 = vsub.s32 0, %v1992
    %v1994 = vrot.slane %v1989, %v1993
    %v1995 = vadd.bf16 %v1951, %v1980
    %v1996 = vadd.bf16 %v1952, %v1987
    %v1997 = vadd.bf16 %v1953, %v1994
    %v1998 = vmax.bf16 %v1995, 0
    %v1999 = vmax.bf16 %v1996, 0
    %v2000 = vmax.bf16 %v1997, 0
    %v2001 = vld [vmem:[#allocation12] sm:$0xf]
    %v2002 = vld [vmem:[#allocation12 + $0x4] sm:$0xf]
    %v2003 = vld [vmem:[#allocation12 + $0x8] sm:$0xf]
    %v2004 = vld [vmem:[#allocation12 + $0xc] sm:$0xf]
    %v2005 = vld [vmem:[#allocation12 + $0x10] sm:$0xf]
    %v2006 = vld [vmem:[#allocation12 + $0x14] sm:$0xf]
    %v2007 = vld [vmem:[#allocation12 + $0x18] sm:$0xf]
    %v2008 = vld [vmem:[#allocation12 + $0x1c] sm:$0xf]
    %v2009 = vld [vmem:[#allocation12 + $0x20] sm:$0xf]
    %v2010 = vld [vmem:[#allocation12 + $0x24] sm:$0xf]
    %v2011 = vld [vmem:[#allocation12 + $0x28] sm:$0xf]
    %v2012 = vld [vmem:[#allocation12 + $0x2c] sm:$0xf]
    %v2013 = vld [vmem:[#allocation12 + $0x30] sm:$0xf]
    %v2014 = vld [vmem:[#allocation12 + $0x34] sm:$0xf]
    %v2015 = vld [vmem:[#allocation12 + $0x38] sm:$0xf]
    %v2016 = vld [vmem:[#allocation12 + $0x3c] sm:$0xf]
    %v2017 = vld [vmem:[#allocation12 + $0x40] sm:$0xf]
    %v2018 = vld [vmem:[#allocation12 + $0x44] sm:$0xf]
    %v2019 = vld [vmem:[#allocation12 + $0x48] sm:$0xf]
    %v2020 = vld [vmem:[#allocation12 + $0x4c] sm:$0xf]
    %v2021 = vld [vmem:[#allocation12 + $0x50] sm:$0xf]
    %v2022 = vld [vmem:[#allocation12 + $0x54] sm:$0xf]
    %v2023 = vld [vmem:[#allocation12 + $0x58] sm:$0xf]
    %v2024 = vld [vmem:[#allocation12 + $0x5c] sm:$0xf]
    %v2025 = vld [vmem:[#allocation12 + $0x60] sm:$0xf]
    %v2026 = vld [vmem:[#allocation12 + $0x64] sm:$0xf]
    %v2027 = vld [vmem:[#allocation12 + $0x68] sm:$0xf]
    %v2028 = vld [vmem:[#allocation12 + $0x6c] sm:$0xf]
    %v2029 = vld [vmem:[#allocation12 + $0x70] sm:$0xf]
    %v2030 = vld [vmem:[#allocation12 + $0x74] sm:$0xf]
    %v2031 = vld [vmem:[#allocation12 + $0x78] sm:$0xf]
    %v2032 = vld [vmem:[#allocation12 + $0x7c] sm:$0xf]
    %v2033 = vld [vmem:[#allocation12 + $0x80] sm:$0xf]
    %v2034 = vld [vmem:[#allocation12 + $0x84] sm:$0xf]
    %v2035 = vld [vmem:[#allocation12 + $0x88] sm:$0xf]
    %v2036 = vld [vmem:[#allocation12 + $0x8c] sm:$0xf]
    %v2037 = vld [vmem:[#allocation12 + $0x90] sm:$0xf]
    %v2038 = vld [vmem:[#allocation12 + $0x94] sm:$0xf]
    %v2039 = vld [vmem:[#allocation12 + $0x98] sm:$0xf]
    %v2040 = vld [vmem:[#allocation12 + $0x9c] sm:$0xf]
    %v2041 = vld [vmem:[#allocation12 + $0xa0] sm:$0xf]
    %v2042 = vld [vmem:[#allocation12 + $0xa4] sm:$0xf]
    %v2043 = vld [vmem:[#allocation12 + $0xa8] sm:$0xf]
    %v2044 = vld [vmem:[#allocation12 + $0xac] sm:$0xf]
    %v2045 = vld [vmem:[#allocation12 + $0xb0] sm:$0xf]
    %v2046 = vld [vmem:[#allocation12 + $0xb4] sm:$0xf]
    %v2047 = vld [vmem:[#allocation12 + $0xb8] sm:$0xf]
    %v2048 = vld [vmem:[#allocation12 + $0xbc] sm:$0xf]
    %v2097 = vunpack.c.l.b16 %v2001
    %v2098 = vunpack.c.l.b16 %v2002
    %v2099 = vunpack.c.l.b16 %v2003
    %v2100 = vunpack.c.l.b16 %v2004
    %v2101 = vunpack.c.l.b16 %v2005
    %v2102 = vunpack.c.l.b16 %v2006
    %v2103 = vunpack.c.l.b16 %v2007
    %v2104 = vunpack.c.l.b16 %v2008
    %v2105 = vunpack.c.l.b16 %v2009
    %v2106 = vunpack.c.l.b16 %v2010
    %v2107 = vunpack.c.l.b16 %v2011
    %v2108 = vunpack.c.l.b16 %v2012
    %v2109 = vunpack.c.l.b16 %v2013
    %v2110 = vunpack.c.l.b16 %v2014
    %v2111 = vunpack.c.l.b16 %v2015
    %v2112 = vunpack.c.l.b16 %v2016
    %v2113 = vunpack.c.l.b16 %v2017
    %v2114 = vunpack.c.l.b16 %v2018
    %v2115 = vunpack.c.l.b16 %v2019
    %v2116 = vunpack.c.l.b16 %v2020
    %v2117 = vunpack.c.l.b16 %v2021
    %v2118 = vunpack.c.l.b16 %v2022
    %v2119 = vunpack.c.l.b16 %v2023
    %v2120 = vunpack.c.l.b16 %v2024
    %v2121 = vunpack.c.l.b16 %v2025
    %v2122 = vunpack.c.l.b16 %v2026
    %v2123 = vunpack.c.l.b16 %v2027
    %v2124 = vunpack.c.l.b16 %v2028
    %v2125 = vunpack.c.l.b16 %v2029
    %v2126 = vunpack.c.l.b16 %v2030
    %v2127 = vunpack.c.l.b16 %v2031
    %v2128 = vunpack.c.l.b16 %v2032
    %v2129 = vunpack.c.l.b16 %v2033
    %v2130 = vunpack.c.l.b16 %v2034
    %v2131 = vunpack.c.l.b16 %v2035
    %v2132 = vunpack.c.l.b16 %v2036
    %v2133 = vunpack.c.l.b16 %v2037
    %v2134 = vunpack.c.l.b16 %v2038
    %v2135 = vunpack.c.l.b16 %v2039
    %v2136 = vunpack.c.l.b16 %v2040
    %v2137 = vunpack.c.l.b16 %v2041
    %v2138 = vunpack.c.l.b16 %v2042
    %v2139 = vunpack.c.l.b16 %v2043
    %v2140 = vunpack.c.l.b16 %v2044
    %v2141 = vunpack.c.l.b16 %v2045
    %v2142 = vunpack.c.l.b16 %v2046
    %v2143 = vunpack.c.l.b16 %v2047
    %v2144 = vunpack.c.l.b16 %v2048
    %v2145 = vpack.c.b16 %v2098, %v2097
    %v2146 = vpack.c.b16 %v2100, %v2099
    %v2147 = vpack.c.b16 %v2102, %v2101
    %v2148 = vpack.c.b16 %v2104, %v2103
    %v2149 = vpack.c.b16 %v2106, %v2105
    %v2150 = vpack.c.b16 %v2108, %v2107
    %v2151 = vpack.c.b16 %v2110, %v2109
    %v2152 = vpack.c.b16 %v2112, %v2111
    %v2153 = vpack.c.b16 %v2114, %v2113
    %v2154 = vpack.c.b16 %v2116, %v2115
    %v2155 = vpack.c.b16 %v2118, %v2117
    %v2156 = vpack.c.b16 %v2120, %v2119
    %v2157 = vpack.c.b16 %v2122, %v2121
    %v2158 = vpack.c.b16 %v2124, %v2123
    %v2159 = vpack.c.b16 %v2126, %v2125
    %v2160 = vpack.c.b16 %v2128, %v2127
    %v2161 = vpack.c.b16 %v2130, %v2129
    %v2162 = vpack.c.b16 %v2132, %v2131
    %v2163 = vpack.c.b16 %v2134, %v2133
    %v2164 = vpack.c.b16 %v2136, %v2135
    %v2165 = vpack.c.b16 %v2138, %v2137
    %v2166 = vpack.c.b16 %v2140, %v2139
    %v2167 = vpack.c.b16 %v2142, %v2141
    %v2168 = vpack.c.b16 %v2144, %v2143
    %2193 = vmatprep.subr.bf16.mxu0 0
    %2194 = vmatpush1.bf16.msra.mxu0 %v2145
    %2195 = vmatprep.subr.bf16.mxu0 0
    %2196 = vmatpush1.bf16.msra.mxu0 %v2146
    %2197 = vmatprep.subr.bf16.mxu0 0
    %2198 = vmatpush1.bf16.msra.mxu0 %v2147
    %2199 = vmatprep.subr.bf16.mxu0 0
    %2200 = vmatpush1.bf16.msra.mxu0 %v2148
    %2201 = vmatprep.subr.bf16.mxu0 0
    %2202 = vmatpush1.bf16.msra.mxu0 %v2149
    %2203 = vmatprep.subr.bf16.mxu0 0
    %2204 = vmatpush1.bf16.msra.mxu0 %v2150
    %2205 = vmatprep.subr.bf16.mxu0 0
    %2206 = vmatpush1.bf16.msra.mxu0 %v2151
    %2207 = vmatprep.subr.bf16.mxu0 0
    %2208 = vmatpush1.bf16.msra.mxu0 %v2152
    %2209 = vmatprep.subr.bf16.mxu0 0
    %2210 = vmatpush1.bf16.msra.mxu0 %v2153
    %2211 = vmatprep.subr.bf16.mxu0 0
    %2212 = vmatpush1.bf16.msra.mxu0 %v2154
    %2213 = vmatprep.subr.bf16.mxu0 0
    %2214 = vmatpush1.bf16.msra.mxu0 %v2155
    %2215 = vmatprep.subr.bf16.mxu0 0
    %2216 = vmatpush1.bf16.msra.mxu0 %v2156
    %2217 = vmatprep.subr.bf16.mxu0 0
    %2218 = vmatpush1.bf16.msra.mxu0 %v2157
    %2219 = vmatprep.subr.bf16.mxu0 0
    %2220 = vmatpush1.bf16.msra.mxu0 %v2158
    %2221 = vmatprep.subr.bf16.mxu0 0
    %2222 = vmatpush1.bf16.msra.mxu0 %v2159
    %2223 = vmatprep.subr.bf16.mxu0 0
    %2224 = vmatpush1.bf16.msra.mxu0 %v2160
    %2225 = vmatprep.mubr.bf16.mxu0 %v1999
    %2226 = vmatmul.mubr.bf16.gmra.mrb[0].mxu0 %v1998
    %v2227 = vpop.f32.mrb[0].mxu0
    %v2228 = vadd.f32 0.0, %v2227
    %v2229 = vpop.f32.mrb[0].mxu0
    %v2230 = vpop.f32.mrb[0].mxu0
    %v2231 = vadd.f32 0.0, %v2230
    %v2232 = vpop.f32.mrb[0].mxu0
    %2233 = vdwg.mxu0
    %2234 = vmatprep.subr.bf16.mxu0 0
    %2235 = vmatpush1.bf16.msra.mxu0 %v2161
    %2236 = vmatprep.subr.bf16.mxu0 0
    %2237 = vmatpush1.bf16.msra.mxu0 %v2162
    %2238 = vmatprep.subr.bf16.mxu0 0
    %2239 = vmatpush1.bf16.msra.mxu0 %v2163
    %2240 = vmatprep.subr.bf16.mxu0 0
    %2241 = vmatpush1.bf16.msra.mxu0 %v2164
    %2242 = vmatprep.subr.bf16.mxu0 0
    %2243 = vmatpush1.bf16.msra.mxu0 %v2165
    %2244 = vmatprep.subr.bf16.mxu0 0
    %2245 = vmatpush1.bf16.msra.mxu0 %v2166
    %2246 = vmatprep.subr.bf16.mxu0 0
    %2247 = vmatpush1.bf16.msra.mxu0 %v2167
    %2248 = vmatprep.subr.bf16.mxu0 0
    %2249 = vmatpush1.bf16.msra.mxu0 %v2168
    %2250 = vmatprep.subr.bf16.mxu0 0
    %2251 = vmatpush1.bf16.msra.mxu0 0
    %2252 = vmatprep.subr.bf16.mxu0 0
    %2253 = vmatpush1.bf16.msra.mxu0 0
    %2254 = vmatprep.subr.bf16.mxu0 0
    %2255 = vmatpush1.bf16.msra.mxu0 0
    %2256 = vmatprep.subr.bf16.mxu0 0
    %2257 = vmatpush1.bf16.msra.mxu0 0
    %2258 = vmatprep.subr.bf16.mxu0 0
    %2259 = vmatpush1.bf16.msra.mxu0 0
    %2260 = vmatprep.subr.bf16.mxu0 0
    %2261 = vmatpush1.bf16.msra.mxu0 0
    %2262 = vmatprep.subr.bf16.mxu0 0
    %2263 = vmatpush1.bf16.msra.mxu0 0
    %2264 = vmatprep.subr.bf16.mxu0 0
    %2265 = vmatpush1.bf16.msra.mxu0 0
    %2266 = vmatprep.mubr.bf16.mxu0 0
    %2267 = vmatmul.mubr.bf16.gmra.mrb[0].mxu0 %v2000
    %v2268 = vpop.f32.mrb[0].mxu0
    %v2269 = vadd.f32 %v2228, %v2268
    %v2270 = vpop.f32.mrb[0].mxu0
    %v2271 = vpop.f32.mrb[0].mxu0
    %v2272 = vadd.f32 %v2231, %v2271
    %v2273 = vpop.f32.mrb[0].mxu0
    %2274 = vdwg.mxu0
    %v2275 = vpack.c.bf16 %v2272, %v2269
    %v2276 = vld [vmem:[%s8] sm:$0x1]
    %v2277 = vpack.c.bf16 %v2276, %v2276
    %v2279 = vpack.i.b16 %v2277, %v2277
    %v2281 = vlaneseq
    %v2282 = vshrl.u32 %v2281, 7
    %v2283 = vsub.s32 0, %v2282
    %v2284 = vrot.slane %v2279, %v2283
    %v2285 = vadd.bf16 %v2275, %v2284
    %v2286 = vmax.bf16 %v2285, 0
    %v2287 = vld [vmem:[#allocation13] sm:$0xf]
    %v2288 = vld [vmem:[#allocation13 + $0x4] sm:$0xf]
    %v2289 = vld [vmem:[#allocation13 + $0x8] sm:$0xf]
    %v2290 = vld [vmem:[#allocation13 + $0xc] sm:$0xf]
    %v2291 = vld [vmem:[#allocation13 + $0x10] sm:$0xf]
    %v2292 = vld [vmem:[#allocation13 + $0x14] sm:$0xf]
    %v2293 = vld [vmem:[#allocation13 + $0x18] sm:$0xf]
    %v2294 = vld [vmem:[#allocation13 + $0x1c] sm:$0xf]
    %v2295 = vld [vmem:[#allocation13 + $0x20] sm:$0xf]
    %v2296 = vld [vmem:[#allocation13 + $0x24] sm:$0xf]
    %v2297 = vld [vmem:[#allocation13 + $0x28] sm:$0xf]
    %v2298 = vld [vmem:[#allocation13 + $0x2c] sm:$0xf]
    %v2299 = vld [vmem:[#allocation13 + $0x30] sm:$0xf]
    %v2300 = vld [vmem:[#allocation13 + $0x34] sm:$0xf]
    %v2301 = vld [vmem:[#allocation13 + $0x38] sm:$0xf]
    %v2302 = vld [vmem:[#allocation13 + $0x3c] sm:$0xf]
    %v2319 = vunpack.c.l.b16 %v2287
    %v2320 = vunpack.c.l.b16 %v2288
    %v2321 = vunpack.c.l.b16 %v2289
    %v2322 = vunpack.c.l.b16 %v2290
    %v2323 = vunpack.c.l.b16 %v2291
    %v2324 = vunpack.c.l.b16 %v2292
    %v2325 = vunpack.c.l.b16 %v2293
    %v2326 = vunpack.c.l.b16 %v2294
    %v2327 = vunpack.c.l.b16 %v2295
    %v2328 = vunpack.c.l.b16 %v2296
    %v2329 = vunpack.c.l.b16 %v2297
    %v2330 = vunpack.c.l.b16 %v2298
    %v2331 = vunpack.c.l.b16 %v2299
    %v2332 = vunpack.c.l.b16 %v2300
    %v2333 = vunpack.c.l.b16 %v2301
    %v2334 = vunpack.c.l.b16 %v2302
    %v2335 = vpack.c.b16 %v2320, %v2319
    %v2336 = vpack.c.b16 %v2322, %v2321
    %v2337 = vpack.c.b16 %v2324, %v2323
    %v2338 = vpack.c.b16 %v2326, %v2325
    %v2339 = vpack.c.b16 %v2328, %v2327
    %v2340 = vpack.c.b16 %v2330, %v2329
    %v2341 = vpack.c.b16 %v2332, %v2331
    %v2342 = vpack.c.b16 %v2334, %v2333
    %2351 = vmatprep.subr.bf16.mxu0 0
    %2352 = vmatpush1.bf16.msra.mxu0 %v2335
    %2353 = vmatprep.subr.bf16.mxu0 0
    %2354 = vmatpush1.bf16.msra.mxu0 %v2336
    %2355 = vmatprep.subr.bf16.mxu0 0
    %2356 = vmatpush1.bf16.msra.mxu0 %v2337
    %2357 = vmatprep.subr.bf16.mxu0 0
    %2358 = vmatpush1.bf16.msra.mxu0 %v2338
    %2359 = vmatprep.subr.bf16.mxu0 0
    %2360 = vmatpush1.bf16.msra.mxu0 %v2339
    %2361 = vmatprep.subr.bf16.mxu0 0
    %2362 = vmatpush1.bf16.msra.mxu0 %v2340
    %2363 = vmatprep.subr.bf16.mxu0 0
    %2364 = vmatpush1.bf16.msra.mxu0 %v2341
    %2365 = vmatprep.subr.bf16.mxu0 0
    %2366 = vmatpush1.bf16.msra.mxu0 %v2342
    %2367 = vmatprep.subr.bf16.mxu0 0
    %2368 = vmatpush1.bf16.msra.mxu0 0
    %2369 = vmatprep.subr.bf16.mxu0 0
    %2370 = vmatpush1.bf16.msra.mxu0 0
    %2371 = vmatprep.subr.bf16.mxu0 0
    %2372 = vmatpush1.bf16.msra.mxu0 0
    %2373 = vmatprep.subr.bf16.mxu0 0
    %2374 = vmatpush1.bf16.msra.mxu0 0
    %2375 = vmatprep.subr.bf16.mxu0 0
    %2376 = vmatpush1.bf16.msra.mxu0 0
    %2377 = vmatprep.subr.bf16.mxu0 0
    %2378 = vmatpush1.bf16.msra.mxu0 0
    %2379 = vmatprep.subr.bf16.mxu0 0
    %2380 = vmatpush1.bf16.msra.mxu0 0
    %2381 = vmatprep.subr.bf16.mxu0 0
    %2382 = vmatpush1.bf16.msra.mxu0 0
    %2383 = vmatprep.mubr.bf16.mxu0 0
    %2384 = vmatmul.mubr.bf16.gmra.mrb[0].mxu0 %v2286
    %v2385 = vpop.f32.mrb[0].mxu0
    %v2386 = vadd.f32 0.0, %v2385
    %v2387 = vpop.f32.mrb[0].mxu0
    %v2388 = vpop.f32.mrb[0].mxu0
    %v2389 = vadd.f32 0.0, %v2388
    %v2390 = vpop.f32.mrb[0].mxu0
    %2391 = vdwg.mxu0
    %v2392 = vpack.c.bf16 %v2389, %v2386
    %v2393 = vld [vmem:[%s10] sm:$0x1]
    %v2394 = vpack.c.bf16 %v2393, %v2393
    %v2396 = vpack.i.b16 %v2394, %v2394
    %v2398 = vlaneseq
    %v2399 = vshrl.u32 %v2398, 7
    %v2400 = vsub.s32 0, %v2399
    %v2401 = vrot.slane %v2396, %v2400
    %v2402 = vadd.bf16 %v2392, %v2401
    %v2403 = vmax.bf16 %v2402, 0
    %v2404 = vld [vmem:[%s11] sm:$0xf]
    %v2405 = vld [vmem:[%s11 + $0x4] sm:$0xf]
    %v2406 = vld [vmem:[%s11 + $0x8] sm:$0xf]
    %v2407 = vld [vmem:[%s11 + $0xc] sm:$0xf]
    %v2408 = vld [vmem:[%s11 + $0x10] sm:$0xf]
    %v2409 = vld [vmem:[%s11 + $0x14] sm:$0xf]
    %v2410 = vld [vmem:[%s11 + $0x18] sm:$0xf]
    %v2411 = vld [vmem:[%s11 + $0x1c] sm:$0xf]
    %v2412 = vld [vmem:[%s11 + $0x20] sm:$0xf]
    %v2413 = vld [vmem:[%s11 + $0x24] sm:$0xf]
    %v2414 = vld [vmem:[%s11 + $0x28] sm:$0xf]
    %v2415 = vld [vmem:[%s11 + $0x2c] sm:$0xf]
    %v2416 = vld [vmem:[%s11 + $0x30] sm:$0xf]
    %v2417 = vld [vmem:[%s11 + $0x34] sm:$0xf]
    %v2418 = vld [vmem:[%s11 + $0x38] sm:$0xf]
    %v2419 = vld [vmem:[%s11 + $0x3c] sm:$0xf]
    %v2420 = vld [vmem:[%s12] sm:$0x1]
    %v2422 = vlaneseq
    %v2423 = vshrl.u32 %v2422, 7
    %v2424 = vsub.s32 0, %v2423
    %v2425 = vrot.slane %v2420, %v2424
    %v2443 = vunpack.c.l.b16 %v2404
    %v2444 = vunpack.c.l.b16 %v2405
    %v2445 = vunpack.c.l.b16 %v2406
    %v2446 = vunpack.c.l.b16 %v2407
    %v2447 = vunpack.c.l.b16 %v2408
    %v2448 = vunpack.c.l.b16 %v2409
    %v2449 = vunpack.c.l.b16 %v2410
    %v2450 = vunpack.c.l.b16 %v2411
    %v2451 = vunpack.c.l.b16 %v2412
    %v2452 = vunpack.c.l.b16 %v2413
    %v2453 = vunpack.c.l.b16 %v2414
    %v2454 = vunpack.c.l.b16 %v2415
    %v2455 = vunpack.c.l.b16 %v2416
    %v2456 = vunpack.c.l.b16 %v2417
    %v2457 = vunpack.c.l.b16 %v2418
    %v2458 = vunpack.c.l.b16 %v2419
    %v2459 = vpack.c.b16 %v2444, %v2443
    %v2460 = vpack.c.b16 %v2446, %v2445
    %v2461 = vpack.c.b16 %v2448, %v2447
    %v2462 = vpack.c.b16 %v2450, %v2449
    %v2463 = vpack.c.b16 %v2452, %v2451
    %v2464 = vpack.c.b16 %v2454, %v2453
    %v2465 = vpack.c.b16 %v2456, %v2455
    %v2466 = vpack.c.b16 %v2458, %v2457
    %2475 = vmatprep.subr.bf16.mxu0 0
    %2476 = vmatpush1.bf16.msra.mxu0 %v2459
    %2477 = vmatprep.subr.bf16.mxu0 0
    %2478 = vmatpush1.bf16.msra.mxu0 %v2460
    %2479 = vmatprep.subr.bf16.mxu0 0
    %2480 = vmatpush1.bf16.msra.mxu0 %v2461
    %2481 = vmatprep.subr.bf16.mxu0 0
    %2482 = vmatpush1.bf16.msra.mxu0 %v2462
    %2483 = vmatprep.subr.bf16.mxu0 0
    %2484 = vmatpush1.bf16.msra.mxu0 %v2463
    %2485 = vmatprep.subr.bf16.mxu0 0
    %2486 = vmatpush1.bf16.msra.mxu0 %v2464
    %2487 = vmatprep.subr.bf16.mxu0 0
    %2488 = vmatpush1.bf16.msra.mxu0 %v2465
    %2489 = vmatprep.subr.bf16.mxu0 0
    %2490 = vmatpush1.bf16.msra.mxu0 %v2466
    %2491 = vmatprep.subr.bf16.mxu0 0
    %2492 = vmatpush1.bf16.msra.mxu0 0
    %2493 = vmatprep.subr.bf16.mxu0 0
    %2494 = vmatpush1.bf16.msra.mxu0 0
    %2495 = vmatprep.subr.bf16.mxu0 0
    %2496 = vmatpush1.bf16.msra.mxu0 0
    %2497 = vmatprep.subr.bf16.mxu0 0
    %2498 = vmatpush1.bf16.msra.mxu0 0
    %2499 = vmatprep.subr.bf16.mxu0 0
    %2500 = vmatpush1.bf16.msra.mxu0 0
    %2501 = vmatprep.subr.bf16.mxu0 0
    %2502 = vmatpush1.bf16.msra.mxu0 0
    %2503 = vmatprep.subr.bf16.mxu0 0
    %2504 = vmatpush1.bf16.msra.mxu0 0
    %2505 = vmatprep.subr.bf16.mxu0 0
    %2506 = vmatpush1.bf16.msra.mxu0 0
    %2507 = vmatprep.mubr.bf16.mxu0 0
    %2508 = vmatmul.mubr.bf16.gmra.mrb[0].mxu0 %v2403
    %v2509 = vpop.f32.mrb[0].mxu0
    %v2510 = vadd.f32 %v2425, %v2509
    %v2511 = vpop.f32.mrb[0].mxu0
    %v2512 = vpop.f32.mrb[0].mxu0
    %v2513 = vadd.f32 %v2425, %v2512
    %v2514 = vpop.f32.mrb[0].mxu0
    %2515 = vdwg.mxu0
    %v2516 = vpack.c.bf16 %v2513, %v2510
    %v2518 = vunpack.c.l.b16 %v2516
    %v2519 = vunpack.c.h.b16 %v2516
    %v2520 = vpack.c.b16 %v2518, %v2518
    %v2521 = vpack.c.b16 %v2519, %v2519
    %2524 = vst [vmem:[%s13] sm:$0xf] %v2520
    %2525 = vst [vmem:[%s13 + $0x4] sm:$0xf] %v2521
    // Predicated region
    $region86: #{linear_net_forward.1} parent=1 // pred_check
      _
    $region87: #{linear_net_forward.1} parent=1 // pred_check_branch
      %2527 = sbr.rel (0) target = $region89
    $region88: #{linear_net_forward.1} parent=1 // pred_region
      _
    $region89: #{linear_net_forward.1} parent=1 // pred_fallthru
      _
    // Predicated region
    $region90: #{linear_net_forward.1} parent=1 // pred_check
      _
    $region91: #{linear_net_forward.1} parent=1 // pred_check_branch
      %2529 = sbr.rel (0) target = $region93
    $region92: #{linear_net_forward.1} parent=1 // pred_region
      _
    $region93: #{linear_net_forward.1} parent=1 // pred_fallthru
      _
    %2530 = vsyncpa [#allocation3], 1
    %2531 = vsyncpa [#allocation5], 1
    %2532 = vsyncpa [#allocation8], 1
    %2533 = vsyncpa [#allocation11], 1
    %2534 = vsyncpa [#allocation14], 1

</llo_original>
